<compile_context>
chip_gen: v5e
topology: v5e:2x2
jax: 0.10.0
libtpu: 0.0.40
codegen_flags: <defaults>
</compile_context>

<pallas_src>
import numpy as np
import jax
import jax.numpy as jnp
from jax.experimental import pallas as pl
from jax.experimental.pallas import tpu as pltpu


# ----------------------------------------------------------------------------
# Kernel
# ----------------------------------------------------------------------------
def _riesz_layer_kernel(x_ref, fwd_ref, mult_ref, wbig_ref, inv_ref, b_ref, o_ref):
    """One batch chunk of the Riesz layer.

    x_ref   : (1, Bt*C, HWp)        flattened, zero-padded images of the chunk
    fwd_ref : (HWp, 2*HWp)          [F2_re | F2_im]           (forward 2-D DFT)
    mult_ref: (5, 2*HWp)            frequency multipliers (signs folded)
    wbig_ref: (Bt*O, 5*Bt*C)        batch-block-diagonal 1x1-conv weights
    inv_ref : (2*HWp, HWp)          [F2_re ; F2_im] / HW      (real inverse DFT)
    b_ref   : (Bt*O, 1)             bias (tiled over the chunk's batch)
    o_ref   : (1, Bt*O, HWp)
    """
    hwp = o_ref.shape[-1]

    def mm(a, b):
        # Default Mosaic f32 matmul precision (empirically passes atol=1e-3).
        return jnp.dot(a, b, preferred_element_type=jnp.float32)

    # ---- Forward 2-D DFT of the whole chunk in one fat matmul ---------------
    x = x_ref[0]                                   # (Bt*C, HWp)
    xf = mm(x, fwd_ref[...])                       # (Bt*C, 2*HWp) = [Re | Im]
    xre = xf[:, :hwp]
    xim = xf[:, hwp:]
    xf_sw = jnp.concatenate([xim, xre], axis=-1)   # [Im | Re] (for the i*m filters)

    # ---- Frequency multiply: build the stacked operand ----------------------
    # Row block f of p is mult[f] * source, where rows 0-1 (filters r1, r2,
    # purely imaginary) read [Im | Re] with the sre minus-sign folded into
    # mult, and rows 2-4 (r1^2, r2^2, r1*r2, purely real) read [Re | Im].
    parts = []
    for f in range(5):
        src = xf_sw if f < 2 else xf
        parts.append(mult_ref[f:f + 1, :] * src)   # (Bt*C, 2*HWp), sublane bcast
    p = jnp.concatenate(parts, axis=0)             # (5*Bt*C, 2*HWp)

    # ---- 1x1 conv contraction (single stacked matmul) -----------------------
    s2 = mm(wbig_ref[...], p)                      # (Bt*O, 2*HWp) = [S_re | S_im]

    # ---- Real inverse 2-D DFT + bias (1/HW folded into inv) -----------------
    out = mm(s2, inv_ref[...]) + b_ref[...]        # (Bt*O, HWp), lane-dense
    o_ref[0] = out


# ----------------------------------------------------------------------------
# Host-side constants
# ----------------------------------------------------------------------------
def _riesz_constants(h, w, hwp):
    """Forward/inverse DFT constants and Riesz frequency multipliers.

    Math note: torch does fftshift(fft2(I)) * R then ifft2(ifftshift(.)).  The
    shifts are permutations that cancel, so this equals fft2(I) * ifftshift(R)
    followed by ifft2 -- which is what these constants implement.
    """
    hw = h * w
    # Full 2-D DFT matrix F2 = kron(F_H, F_W); symmetric (F2^T == F2).
    fh = np.exp(-2j * np.pi * np.outer(np.arange(h), np.arange(h)) / h)
    fw = np.exp(-2j * np.pi * np.outer(np.arange(w), np.arange(w)) / w)
    f2 = np.kron(fh, fw)
    f2r, f2i = f2.real, f2.imag

    # Riesz multipliers in unshifted (ifftshift-ed) layout, flattened to HW.
    u = (np.arange(h, dtype=np.float64).reshape(-1, 1) - h / 2) / h
    v = (np.arange(w, dtype=np.float64).reshape(1, -1) - w / 2) / w
    denom = np.sqrt(u ** 2 + v ** 2)
    with np.errstate(divide="ignore", invalid="ignore"):
        r1 = -1j * u / denom
        r2 = -1j * v / denom
    r1[h // 2, w // 2] = 0.0
    r2[h // 2, w // 2] = 0.0
    mim = np.stack([np.fft.ifftshift(f).imag.reshape(hw) for f in (r1, r2)])
    mre = np.stack([np.fft.ifftshift(f).real.reshape(hw)
                    for f in (r1 * r1, r2 * r2, r1 * r2)])

    # Forward constant: [F2_re | F2_im] (HWp, 2*HWp), zero pad rows/cols.
    fwd = np.zeros((hwp, 2 * hwp), np.float32)
    fwd[:hw, :hw] = f2r
    fwd[:hw, hwp:hwp + hw] = f2i

    # Inverse constant: [F2_re ; F2_im] / HW (2*HWp, HWp).
    # Re(ifft2(S)) = (S_re @ F2_re + S_im @ F2_im) / HW   (F2 symmetric).
    inv = np.zeros((2 * hwp, hwp), np.float32)
    inv[:hw, :hw] = f2r / hw
    inv[hwp:hwp + hw, :hw] = f2i / hw

    # Combined multipliers (5, 2*HWp).  Rows 0-1: filters r1, r2 are purely
    # imaginary (i*mim); acting on [Im | Re] gives [-mim*Im | +mim*Re] which is
    # exactly [Re-, Im-contribution] with the minus sign folded in.  Rows 2-4:
    # purely real filters applied to [Re | Im] as-is.
    mult = np.zeros((5, 2 * hwp), np.float32)
    mult[0, :hw], mult[0, hwp:hwp + hw] = -mim[0], mim[0]
    mult[1, :hw], mult[1, hwp:hwp + hw] = -mim[1], mim[1]
    for k in range(3):
        mult[2 + k, :hw] = mre[k]
        mult[2 + k, hwp:hwp + hw] = mre[k]

    return jnp.asarray(fwd), jnp.asarray(mult), jnp.asarray(inv)


# ----------------------------------------------------------------------------
# Wrapper
# ----------------------------------------------------------------------------
def riesz_layer(x, conv_w, conv_b, *, batch_chunks=None):
    """x: [B, C, H, W] f32; conv_w: [O, 5*C] f32 (feature index 5*c + f);
    conv_b: [O] f32.  Returns [B, O, H, W] f32."""
    B, C, H, W = x.shape
    O = conv_b.shape[0]
    HW = H * W
    HWp = ((HW + 127) // 128) * 128                # lane-dense padded size

    if batch_chunks is None:
        # 2 parallel chunks keep both v7x TensorCores busy; costs one extra
        # ~0.35us grid step on single-TC v5e/v6e.  Pass batch_chunks=1 there
        # to fold the whole batch into one fat-M step.
        batch_chunks = 2 if (B % 2 == 0 and B >= 2) else 1
    assert B % batch_chunks == 0, "batch_chunks must divide the batch"
    n_chunks = batch_chunks
    Bt = B // n_chunks

    fwd, mult, inv = _riesz_constants(H, W, HWp)

    # 1x1-conv weights regrouped to column order f*C + c, then expanded to a
    # batch-block-diagonal matrix so the whole chunk contracts in one matmul:
    #   wbig[b*O + o, f*Bt*C + b*C + c] = conv_w[o, 5*c + f]
    w_fc = jnp.transpose(conv_w.reshape(O, C, 5), (0, 2, 1))            # (O, 5, C)
    wbig = jnp.einsum("ofc,bd->bofdc", w_fc, jnp.eye(Bt, dtype=conv_w.dtype))
    wbig = wbig.reshape(Bt * O, 5 * Bt * C)
    bias = jnp.tile(conv_b, Bt).reshape(Bt * O, 1)                      # row b*O+o

    # Flatten + lane-pad the images, then split into chunks (all free/cheap).
    x_flat = x.reshape(B * C, HW)
    if HWp != HW:
        x_flat = jnp.pad(x_flat, ((0, 0), (0, HWp - HW)))
    x_p = x_flat.reshape(n_chunks, Bt * C, HWp)

    # Scheduling hint for XLA around the custom call.
    flops = (2 * B * C * HWp * 2 * HWp                       # forward DFT
             + 2 * n_chunks * (Bt * O) * (5 * Bt * C) * 2 * HWp   # freq contraction
             + 2 * B * O * 2 * HWp * HWp)                    # inverse DFT
    bytes_accessed = 4 * (B * C * HWp + B * O * HWp + 4 * HWp * HWp
                          + 10 * HWp + Bt * O * 5 * Bt * C + Bt * O)
    cost = pl.CostEstimate(flops=flops, transcendentals=0,
                           bytes_accessed=bytes_accessed)

    def build_call(single_buffer_consts):
        def cspec(shape):
            idx = lambda i: tuple(0 for _ in shape)
            if single_buffer_consts:
                # Constant block index across the grid -> double buffering only
                # doubles VMEM; request a single buffer.
                return pl.BlockSpec(shape, idx, pipeline_mode=pl.Buffered(1))
            return pl.BlockSpec(shape, idx)

        return pl.pallas_call(
            _riesz_layer_kernel,
            out_shape=jax.ShapeDtypeStruct((n_chunks, Bt * O, HWp), jnp.float32),
            grid=(n_chunks,),
            in_specs=[
                pl.BlockSpec((1, Bt * C, HWp), lambda i: (i, 0, 0)),  # x chunk
                cspec((HWp, 2 * HWp)),                                # forward DFT
                cspec((5, 2 * HWp)),                                  # multipliers
                cspec((Bt * O, 5 * Bt * C)),                          # conv weights
                cspec((2 * HWp, HWp)),                                # inverse DFT
                cspec((Bt * O, 1)),                                   # bias
            ],
            out_specs=pl.BlockSpec((1, Bt * O, HWp), lambda i: (i, 0, 0)),
            compiler_params=pltpu.CompilerParams(
                dimension_semantics=("parallel",),
                vmem_limit_bytes=32 * 1024 * 1024,
            ),
            cost_estimate=cost,
        )

    try:
        out_flat = build_call(True)(x_p, fwd, mult, wbig, inv, bias)
    except Exception:
        # pipeline_mode=pl.Buffered(1) not supported on this jax version ->
        # fall back to default double buffering (correctness identical).
        out_flat = build_call(False)(x_p, fwd, mult, wbig, inv, bias)

    out = out_flat.reshape(B, O, HWp)[:, :, :HW]   # drop lane pad (free slice)
    return out.reshape(B, O, H, W)


# ----------------------------------------------------------------------------
# Pure numpy (float64) reference mirroring the PyTorch module semantics.
# ----------------------------------------------------------------------------
def riesz_layer_ref(x, conv_w, conv_b):
    x = np.asarray(x, dtype=np.float64)
    w = np.asarray(conv_w, dtype=np.float64)
    b = np.asarray(conv_b, dtype=np.float64)
    B, C, H, W = x.shape
    u = (np.arange(H, dtype=np.float64).reshape(-1, 1) - H / 2) / H
    v = (np.arange(W, dtype=np.float64).reshape(1, -1) - W / 2) / W
    denom = np.sqrt(u ** 2 + v ** 2)
    with np.errstate(divide="ignore", invalid="ignore"):
        r1 = -1j * u / denom
        r2 = -1j * v / denom
    r1[H // 2, W // 2] = 0.0
    r2[H // 2, W // 2] = 0.0
    feats = []
    for c in range(C):
        xh = np.fft.fftshift(np.fft.fft2(x[:, c]), axes=(-2, -1))
        for m in (r1, r2, r1 * r1, r2 * r2, r1 * r2):
            feats.append(np.fft.ifft2(np.fft.ifftshift(xh * m, axes=(-2, -1))).real)
    feats = np.stack(feats, axis=1)                          # (B, 5C, H, W)
    out = np.einsum("ok,bkhw->bohw", w, feats) + b[None, :, None, None]
    return out.astype(np.float32)


# ----------------------------------------------------------------------------
# Self-test
# ----------------------------------------------------------------------------
if __name__ == "__main__":
    key = jax.random.PRNGKey(0)

    def make_params(k, C, O):
        kw, kb = jax.random.split(k)
        bound = 1.0 / np.sqrt(5 * C)                 # Conv2d(5C, O, k=1) init bound
        cw = jax.random.uniform(kw, (O, 5 * C), jnp.float32, -bound, bound)
        cb = jax.random.uniform(kb, (O,), jnp.float32, -bound, bound)
        return cw, cb

    k1, k2, k3 = jax.random.split(key, 3)

    # --- small generic case (same shapes as the previously validated run) ----
    B, C, H, W, O = 2, 4, 16, 16, 8
    x = jax.random.normal(k1, (B, C, H, W), dtype=jnp.float32)
    conv_w, conv_b = make_params(k2, C, O)
    ref = riesz_layer_ref(x, conv_w, conv_b)

    out = jax.block_until_ready(riesz_layer(x, conv_w, conv_b))          # grid=(2,)
    np.testing.assert_allclose(np.asarray(out), ref, rtol=1e-2, atol=1e-3)

    out1 = jax.block_until_ready(riesz_layer(x, conv_w, conv_b,
                                             batch_chunks=1))            # fattened M
    np.testing.assert_allclose(np.asarray(out1), ref, rtol=1e-2, atol=1e-3)

    # --- module-faithful case: RieszLayer(1, 32) on 28x28 (WhatEncoder input),
    #     exercises the HW=784 -> HWp=896 lane-padding path --------------------
    B2, C2, H2, W2, O2 = 2, 1, 28, 28, 32
    x2 = jax.random.normal(k3, (B2, C2, H2, W2), dtype=jnp.float32)
    conv_w2, conv_b2 = make_params(jax.random.fold_in(key, 7), C2, O2)
    out2 = jax.block_until_ready(riesz_layer(x2, conv_w2, conv_b2))
    ref2 = riesz_layer_ref(x2, conv_w2, conv_b2)
    np.testing.assert_allclose(np.asarray(out2), ref2, rtol=1e-2, atol=2e-3)

    print("KERNEL_OK")
</pallas_src>

<mosaic_0001>
module attributes {stable_mosaic.version = 11 : i64} {
  func.func @_riesz_layer_kernel(%arg0: i32, %arg1: memref<1x4x256xf32, #tpu.memory_space<vmem>>, %arg2: memref<256x512xf32, #tpu.memory_space<vmem>>, %arg3: memref<5x512xf32, #tpu.memory_space<vmem>>, %arg4: memref<8x20xf32, #tpu.memory_space<vmem>>, %arg5: memref<512x256xf32, #tpu.memory_space<vmem>>, %arg6: memref<8x1xf32, #tpu.memory_space<vmem>>, %arg7: memref<1x8x256xf32, #tpu.memory_space<vmem>>) attributes {dimension_semantics = [#tpu.dimension_semantics<parallel>], iteration_bounds = array<i64: 2>, scalar_prefetch = 0 : i64, scratch_operands = 0 : i64, tpu.core_type = #tpu.core_type<tc>, window_params = [{transform_indices = @transform_0, window_bounds = array<i64: 1, 4, 256>}, {pipeline_mode = #tpu.pipeline_mode<synchronous>, transform_indices = @transform_1, window_bounds = array<i64: 256, 512>}, {pipeline_mode = #tpu.pipeline_mode<synchronous>, transform_indices = @transform_2, window_bounds = array<i64: 5, 512>}, {pipeline_mode = #tpu.pipeline_mode<synchronous>, transform_indices = @transform_3, window_bounds = array<i64: 8, 20>}, {pipeline_mode = #tpu.pipeline_mode<synchronous>, transform_indices = @transform_4, window_bounds = array<i64: 512, 256>}, {pipeline_mode = #tpu.pipeline_mode<synchronous>, transform_indices = @transform_5, window_bounds = array<i64: 8, 1>}, {transform_indices = @transform_6, window_bounds = array<i64: 1, 8, 256>}]} {
    %c0 = arith.constant 0 : index
    %c0_0 = arith.constant 0 : index
    %c0_1 = arith.constant 0 : index
    %0 = vector.load %arg1[%c0, %c0_0, %c0_1] : memref<1x4x256xf32, #tpu.memory_space<vmem>>, vector<1x4x256xf32>
    %1 = vector.shape_cast %0 : vector<1x4x256xf32> to vector<4x256xf32>
    %c0_2 = arith.constant 0 : index
    %c0_3 = arith.constant 0 : index
    %2 = vector.load %arg2[%c0_2, %c0_3] : memref<256x512xf32, #tpu.memory_space<vmem>>, vector<256x512xf32>
    %cst = arith.constant dense<0.000000e+00> : vector<4x512xf32>
    %3 = tpu.matmul %1, %2, %cst {dimension_numbers = #tpu.dot_dimension_numbers<[1], [0], [0], [1], [0, 0, 1, 1], [], []>} : vector<4x256xf32>, vector<256x512xf32>, vector<4x512xf32> -> vector<4x512xf32>
    %4 = vector.extract_strided_slice %3 {offsets = [0, 0], sizes = [4, 256], strides = [1, 1]} : vector<4x512xf32> to vector<4x256xf32>
    %5 = vector.extract_strided_slice %3 {offsets = [0, 256], sizes = [4, 256], strides = [1, 1]} : vector<4x512xf32> to vector<4x256xf32>
    %6 = tpu.concatenate %5, %4 in 1 : vector<4x256xf32>, vector<4x256xf32> -> vector<4x512xf32>
    %c0_4 = arith.constant 0 : index
    %c0_5 = arith.constant 0 : index
    %7 = vector.load %arg3[%c0_4, %c0_5] : memref<5x512xf32, #tpu.memory_space<vmem>>, vector<1x512xf32>
    %8 = vector.broadcast %7 : vector<1x512xf32> to vector<4x512xf32>
    %9 = arith.mulf %8, %6 : vector<4x512xf32>
    %c1 = arith.constant 1 : index
    %c0_6 = arith.constant 0 : index
    %10 = vector.load %arg3[%c1, %c0_6] : memref<5x512xf32, #tpu.memory_space<vmem>>, vector<1x512xf32>
    %11 = vector.broadcast %10 : vector<1x512xf32> to vector<4x512xf32>
    %12 = arith.mulf %11, %6 : vector<4x512xf32>
    %c2 = arith.constant 2 : index
    %c0_7 = arith.constant 0 : index
    %13 = vector.load %arg3[%c2, %c0_7] : memref<5x512xf32, #tpu.memory_space<vmem>>, vector<1x512xf32>
    %14 = vector.broadcast %13 : vector<1x512xf32> to vector<4x512xf32>
    %15 = arith.mulf %14, %3 : vector<4x512xf32>
    %c3 = arith.constant 3 : index
    %c0_8 = arith.constant 0 : index
    %16 = vector.load %arg3[%c3, %c0_8] : memref<5x512xf32, #tpu.memory_space<vmem>>, vector<1x512xf32>
    %17 = vector.broadcast %16 : vector<1x512xf32> to vector<4x512xf32>
    %18 = arith.mulf %17, %3 : vector<4x512xf32>
    %c4 = arith.constant 4 : index
    %c0_9 = arith.constant 0 : index
    %19 = vector.load %arg3[%c4, %c0_9] : memref<5x512xf32, #tpu.memory_space<vmem>>, vector<1x512xf32>
    %20 = vector.broadcast %19 : vector<1x512xf32> to vector<4x512xf32>
    %21 = arith.mulf %20, %3 : vector<4x512xf32>
    %22 = tpu.concatenate %9, %12, %15, %18, %21 in 0 : vector<4x512xf32>, vector<4x512xf32>, vector<4x512xf32>, vector<4x512xf32>, vector<4x512xf32> -> vector<20x512xf32>
    %c0_10 = arith.constant 0 : index
    %c0_11 = arith.constant 0 : index
    %23 = vector.load %arg4[%c0_10, %c0_11] : memref<8x20xf32, #tpu.memory_space<vmem>>, vector<8x20xf32>
    %cst_12 = arith.constant dense<0.000000e+00> : vector<8x512xf32>
    %24 = tpu.matmul %23, %22, %cst_12 {dimension_numbers = #tpu.dot_dimension_numbers<[1], [0], [0], [1], [0, 0, 1, 1], [], []>} : vector<8x20xf32>, vector<20x512xf32>, vector<8x512xf32> -> vector<8x512xf32>
    %c0_13 = arith.constant 0 : index
    %c0_14 = arith.constant 0 : index
    %25 = vector.load %arg5[%c0_13, %c0_14] : memref<512x256xf32, #tpu.memory_space<vmem>>, vector<512x256xf32>
    %cst_15 = arith.constant dense<0.000000e+00> : vector<8x256xf32>
    %26 = tpu.matmul %24, %25, %cst_15 {dimension_numbers = #tpu.dot_dimension_numbers<[1], [0], [0], [1], [0, 0, 1, 1], [], []>} : vector<8x512xf32>, vector<512x256xf32>, vector<8x256xf32> -> vector<8x256xf32>
    %c0_16 = arith.constant 0 : index
    %c0_17 = arith.constant 0 : index
    %27 = vector.load %arg6[%c0_16, %c0_17] : memref<8x1xf32, #tpu.memory_space<vmem>>, vector<8x1xf32>
    %28 = vector.broadcast %27 : vector<8x1xf32> to vector<8x256xf32>
    %29 = arith.addf %26, %28 : vector<8x256xf32>
    %c0_18 = arith.constant 0 : index
    %c0_19 = arith.constant 0 : index
    %c0_20 = arith.constant 0 : index
    %30 = vector.load %arg7[%c0_18, %c0_19, %c0_20] : memref<1x8x256xf32, #tpu.memory_space<vmem>>, vector<1x8x256xf32>
    %31 = vector.shape_cast %30 : vector<1x8x256xf32> to vector<8x256xf32>
    %32 = vector.shape_cast %29 : vector<8x256xf32> to vector<1x8x256xf32>
    tpu.vector_store %arg7[%c0_18, %c0_19, %c0_20], %32 {strides = array<i32>} : memref<1x8x256xf32, #tpu.memory_space<vmem>>, vector<1x8x256xf32>,
    return
  }
  func.func @transform_0(%arg0: i32) -> (i32, i32, i32) {
    %c0_i32 = arith.constant 0 : i32
    %c0_i32_0 = arith.constant 0 : i32
    %c0_i32_1 = arith.constant 0 : i32
    return %arg0, %c0_i32, %c0_i32_0 : i32, i32, i32
  }
  func.func @transform_1(%arg0: i32) -> (i32, i32) {
    %c0_i32 = arith.constant 0 : i32
    %c0_i32_0 = arith.constant 0 : i32
    %c0_i32_1 = arith.constant 0 : i32
    return %c0_i32, %c0_i32_0 : i32, i32
  }
  func.func @transform_2(%arg0: i32) -> (i32, i32) {
    %c0_i32 = arith.constant 0 : i32
    %c0_i32_0 = arith.constant 0 : i32
    %c0_i32_1 = arith.constant 0 : i32
    return %c0_i32, %c0_i32_0 : i32, i32
  }
  func.func @transform_3(%arg0: i32) -> (i32, i32) {
    %c0_i32 = arith.constant 0 : i32
    %c0_i32_0 = arith.constant 0 : i32
    %c0_i32_1 = arith.constant 0 : i32
    return %c0_i32, %c0_i32_0 : i32, i32
  }
  func.func @transform_4(%arg0: i32) -> (i32, i32) {
    %c0_i32 = arith.constant 0 : i32
    %c0_i32_0 = arith.constant 0 : i32
    %c0_i32_1 = arith.constant 0 : i32
    return %c0_i32, %c0_i32_0 : i32, i32
  }
  func.func @transform_5(%arg0: i32) -> (i32, i32) {
    %c0_i32 = arith.constant 0 : i32
    %c0_i32_0 = arith.constant 0 : i32
    %c0_i32_1 = arith.constant 0 : i32
    return %c0_i32, %c0_i32_0 : i32, i32
  }
  func.func @transform_6(%arg0: i32) -> (i32, i32, i32) {
    %c0_i32 = arith.constant 0 : i32
    %c0_i32_0 = arith.constant 0 : i32
    %c0_i32_1 = arith.constant 0 : i32
    return %arg0, %c0_i32, %c0_i32_0 : i32, i32, i32
  }
}

module attributes {stable_mosaic.version = 11 : i64} {
  func.func @_riesz_layer_kernel(%arg0: i32, %arg1: memref<1x4x256xf32, #tpu.memory_space<vmem>>, %arg2: memref<256x512xf32, #tpu.memory_space<vmem>>, %arg3: memref<5x512xf32, #tpu.memory_space<vmem>>, %arg4: memref<8x20xf32, #tpu.memory_space<vmem>>, %arg5: memref<512x256xf32, #tpu.memory_space<vmem>>, %arg6: memref<8x1xf32, #tpu.memory_space<vmem>>, %arg7: memref<1x8x256xf32, #tpu.memory_space<vmem>>) attributes {dimension_semantics = [#tpu.dimension_semantics<parallel>], iteration_bounds = array<i64: 2>, scalar_prefetch = 0 : i64, scratch_operands = 0 : i64, tpu.core_type = #tpu.core_type<tc>, window_params = [{transform_indices = @transform_0, window_bounds = array<i64: 1, 4, 256>}, {pipeline_mode = #tpu.pipeline_mode<synchronous>, transform_indices = @transform_1, window_bounds = array<i64: 256, 512>}, {pipeline_mode = #tpu.pipeline_mode<synchronous>, transform_indices = @transform_2, window_bounds = array<i64: 5, 512>}, {pipeline_mode = #tpu.pipeline_mode<synchronous>, transform_indices = @transform_3, window_bounds = array<i64: 8, 20>}, {pipeline_mode = #tpu.pipeline_mode<synchronous>, transform_indices = @transform_4, window_bounds = array<i64: 512, 256>}, {pipeline_mode = #tpu.pipeline_mode<synchronous>, transform_indices = @transform_5, window_bounds = array<i64: 8, 1>}, {transform_indices = @transform_6, window_bounds = array<i64: 1, 8, 256>}]} {
    %c0 = arith.constant 0 : index
    %c0_0 = arith.constant 0 : index
    %c0_1 = arith.constant 0 : index
    %0 = vector.load %arg1[%c0, %c0_0, %c0_1] : memref<1x4x256xf32, #tpu.memory_space<vmem>>, vector<1x4x256xf32>
    %1 = vector.shape_cast %0 : vector<1x4x256xf32> to vector<4x256xf32>
    %c0_2 = arith.constant 0 : index
    %c0_3 = arith.constant 0 : index
    %2 = vector.load %arg2[%c0_2, %c0_3] : memref<256x512xf32, #tpu.memory_space<vmem>>, vector<256x512xf32>
    %cst = arith.constant dense<0.000000e+00> : vector<4x512xf32>
    %3 = tpu.matmul %1, %2, %cst {dimension_numbers = #tpu.dot_dimension_numbers<[1], [0], [0], [1], [0, 0, 1, 1], [], []>} : vector<4x256xf32>, vector<256x512xf32>, vector<4x512xf32> -> vector<4x512xf32>
    %4 = vector.extract_strided_slice %3 {offsets = [0, 0], sizes = [4, 256], strides = [1, 1]} : vector<4x512xf32> to vector<4x256xf32>
    %5 = vector.extract_strided_slice %3 {offsets = [0, 256], sizes = [4, 256], strides = [1, 1]} : vector<4x512xf32> to vector<4x256xf32>
    %6 = tpu.concatenate %5, %4 in 1 : vector<4x256xf32>, vector<4x256xf32> -> vector<4x512xf32>
    %c0_4 = arith.constant 0 : index
    %c0_5 = arith.constant 0 : index
    %7 = vector.load %arg3[%c0_4, %c0_5] : memref<5x512xf32, #tpu.memory_space<vmem>>, vector<1x512xf32>
    %8 = vector.broadcast %7 : vector<1x512xf32> to vector<4x512xf32>
    %9 = arith.mulf %8, %6 : vector<4x512xf32>
    %c1 = arith.constant 1 : index
    %c0_6 = arith.constant 0 : index
    %10 = vector.load %arg3[%c1, %c0_6] : memref<5x512xf32, #tpu.memory_space<vmem>>, vector<1x512xf32>
    %11 = vector.broadcast %10 : vector<1x512xf32> to vector<4x512xf32>
    %12 = arith.mulf %11, %6 : vector<4x512xf32>
    %c2 = arith.constant 2 : index
    %c0_7 = arith.constant 0 : index
    %13 = vector.load %arg3[%c2, %c0_7] : memref<5x512xf32, #tpu.memory_space<vmem>>, vector<1x512xf32>
    %14 = vector.broadcast %13 : vector<1x512xf32> to vector<4x512xf32>
    %15 = arith.mulf %14, %3 : vector<4x512xf32>
    %c3 = arith.constant 3 : index
    %c0_8 = arith.constant 0 : index
    %16 = vector.load %arg3[%c3, %c0_8] : memref<5x512xf32, #tpu.memory_space<vmem>>, vector<1x512xf32>
    %17 = vector.broadcast %16 : vector<1x512xf32> to vector<4x512xf32>
    %18 = arith.mulf %17, %3 : vector<4x512xf32>
    %c4 = arith.constant 4 : index
    %c0_9 = arith.constant 0 : index
    %19 = vector.load %arg3[%c4, %c0_9] : memref<5x512xf32, #tpu.memory_space<vmem>>, vector<1x512xf32>
    %20 = vector.broadcast %19 : vector<1x512xf32> to vector<4x512xf32>
    %21 = arith.mulf %20, %3 : vector<4x512xf32>
    %22 = tpu.concatenate %9, %12, %15, %18, %21 in 0 : vector<4x512xf32>, vector<4x512xf32>, vector<4x512xf32>, vector<4x512xf32>, vector<4x512xf32> -> vector<20x512xf32>
    %c0_10 = arith.constant 0 : index
    %c0_11 = arith.constant 0 : index
    %23 = vector.load %arg4[%c0_10, %c0_11] : memref<8x20xf32, #tpu.memory_space<vmem>>, vector<8x20xf32>
    %cst_12 = arith.constant dense<0.000000e+00> : vector<8x512xf32>
    %24 = tpu.matmul %23, %22, %cst_12 {dimension_numbers = #tpu.dot_dimension_numbers<[1], [0], [0], [1], [0, 0, 1, 1], [], []>} : vector<8x20xf32>, vector<20x512xf32>, vector<8x512xf32> -> vector<8x512xf32>
    %c0_13 = arith.constant 0 : index
    %c0_14 = arith.constant 0 : index
    %25 = vector.load %arg5[%c0_13, %c0_14] : memref<512x256xf32, #tpu.memory_space<vmem>>, vector<512x256xf32>
    %cst_15 = arith.constant dense<0.000000e+00> : vector<8x256xf32>
    %26 = tpu.matmul %24, %25, %cst_15 {dimension_numbers = #tpu.dot_dimension_numbers<[1], [0], [0], [1], [0, 0, 1, 1], [], []>} : vector<8x512xf32>, vector<512x256xf32>, vector<8x256xf32> -> vector<8x256xf32>
    %c0_16 = arith.constant 0 : index
    %c0_17 = arith.constant 0 : index
    %27 = vector.load %arg6[%c0_16, %c0_17] : memref<8x1xf32, #tpu.memory_space<vmem>>, vector<8x1xf32>
    %28 = vector.broadcast %27 : vector<8x1xf32> to vector<8x256xf32>
    %29 = arith.addf %26, %28 : vector<8x256xf32>
    %c0_18 = arith.constant 0 : index
    %c0_19 = arith.constant 0 : index
    %c0_20 = arith.constant 0 : index
    %30 = vector.load %arg7[%c0_18, %c0_19, %c0_20] : memref<1x8x256xf32, #tpu.memory_space<vmem>>, vector<1x8x256xf32>
    %31 = vector.shape_cast %30 : vector<1x8x256xf32> to vector<8x256xf32>
    %32 = vector.shape_cast %29 : vector<8x256xf32> to vector<1x8x256xf32>
    tpu.vector_store %arg7[%c0_18, %c0_19, %c0_20], %32 {strides = array<i32>} : memref<1x8x256xf32, #tpu.memory_space<vmem>>, vector<1x8x256xf32>,
    return
  }
  func.func @transform_0(%arg0: i32) -> (i32, i32, i32) {
    %c0_i32 = arith.constant 0 : i32
    %c0_i32_0 = arith.constant 0 : i32
    %c0_i32_1 = arith.constant 0 : i32
    return %arg0, %c0_i32, %c0_i32_0 : i32, i32, i32
  }
  func.func @transform_1(%arg0: i32) -> (i32, i32) {
    %c0_i32 = arith.constant 0 : i32
    %c0_i32_0 = arith.constant 0 : i32
    %c0_i32_1 = arith.constant 0 : i32
    return %c0_i32, %c0_i32_0 : i32, i32
  }
  func.func @transform_2(%arg0: i32) -> (i32, i32) {
    %c0_i32 = arith.constant 0 : i32
    %c0_i32_0 = arith.constant 0 : i32
    %c0_i32_1 = arith.constant 0 : i32
    return %c0_i32, %c0_i32_0 : i32, i32
  }
  func.func @transform_3(%arg0: i32) -> (i32, i32) {
    %c0_i32 = arith.constant 0 : i32
    %c0_i32_0 = arith.constant 0 : i32
    %c0_i32_1 = arith.constant 0 : i32
    return %c0_i32, %c0_i32_0 : i32, i32
  }
  func.func @transform_4(%arg0: i32) -> (i32, i32) {
    %c0_i32 = arith.constant 0 : i32
    %c0_i32_0 = arith.constant 0 : i32
    %c0_i32_1 = arith.constant 0 : i32
    return %c0_i32, %c0_i32_0 : i32, i32
  }
  func.func @transform_5(%arg0: i32) -> (i32, i32) {
    %c0_i32 = arith.constant 0 : i32
    %c0_i32_0 = arith.constant 0 : i32
    %c0_i32_1 = arith.constant 0 : i32
    return %c0_i32, %c0_i32_0 : i32, i32
  }
  func.func @transform_6(%arg0: i32) -> (i32, i32, i32) {
    %c0_i32 = arith.constant 0 : i32
    %c0_i32_0 = arith.constant 0 : i32
    %c0_i32_1 = arith.constant 0 : i32
    return %arg0, %c0_i32, %c0_i32_0 : i32, i32, i32
  }
}

</mosaic_0001>

<llo_original>
// kernel: tpu_custom_call.1
$region0: #{tpu_custom_call.1}
  #allocation0 [shape = 'u32[]', space=smem, size = 0x4, offset = 0x4, fixed_abs, tag = 'smem constant byte address 0x4 - core index']
  #allocation1 [shape = 'u32[72,128]{1,0:T(1,128)}', space=vmem, size = 0x9000, scoped, tag = 'internal scratch']
  %s0 = inlined_call_operand.hbm [shape: f32[2,4,256], index: 0, kind: input, shape index: {}]
  %s1 = inlined_call_operand.hbm [shape: f32[256,512], index: 1, kind: input, shape index: {}]
  %s2 = inlined_call_operand.hbm [shape: f32[5,512], index: 2, kind: input, shape index: {}]
  %s3 = inlined_call_operand.vmem [shape: f32[8,20], index: 3, kind: input, shape index: {}]
  %s4 = inlined_call_operand.hbm [shape: f32[512,256], index: 4, kind: input, shape index: {}]
  %s5 = inlined_call_operand.vmem [shape: f32[8,1], index: 5, kind: input, shape index: {}]
  %s6 = inlined_call_operand.hbm [shape: f32[2,8,256], index: 6, kind: output, shape index: {}]
  %s7 = sld [smem:[#allocation0]]
  $region73: #{tpu_custom_call.1} parent=0
    _
  %s9 = ssub.s32 1, %s7
  %s10 = scalar_select 0, %s9, %s7
  $region1: #{tpu_custom_call.1} parent=0
    #allocation2 [shape = 'u8[8192]{0}', space=vmem, size = 0x2000, scoped, tag = 'input window, operand 0']
    #allocation3 [shape = 's32[2]{0}', space=sflag, size = 0x8, scoped, tag = 'scoped memory for tpu_custom_call.1']
    #allocation4 [shape = 's32[2]{0}', space=sflag, size = 0x8, scoped, tag = 'scoped memory for tpu_custom_call.1']
    #allocation5 [shape = 'u8[524288]{0}', space=vmem, size = 0x80000, scoped, tag = 'input window, operand 1, single buffered']
    #allocation6 [shape = 's32[1]{0}', space=sflag, size = 0x4, scoped, tag = 'scoped memory for tpu_custom_call.1']
    #allocation7 [shape = 'u8[16384]{0}', space=vmem, size = 0x4000, scoped, tag = 'input window, operand 2, single buffered']
    #allocation8 [shape = 'u8[524288]{0}', space=vmem, size = 0x80000, scoped, tag = 'input window, operand 4, single buffered']
    #allocation9 [shape = 's32[1]{0}', space=sflag, size = 0x4, scoped, tag = 'scoped memory for tpu_custom_call.1']
    #allocation10 [shape = 'u8[16384]{0}', space=vmem, size = 0x4000, scoped, tag = 'output window, operand 0']
    %11 = vsyncpa [#allocation3], 0
    %s12 = scalar_lea.sflag [#allocation3], 1
    %13 = vsyncpa %s12, 0
    %14 = vsyncpa [#allocation6], 0
    %15 = vsyncpa [#allocation9], 0
    %16 = vsyncpa [#allocation4], 0
    %s17 = scalar_lea.sflag [#allocation4], 1
    %18 = vsyncpa %s17, 0
    loop: start=0, step=1, limit=4
    $region2: #{tpu_custom_call.1} parent=1 // loop_pre_header
      _
    $region3: #{tpu_custom_call.1} parent=1 // loop_header
      %s20 = sphi 0, %s24
      %p21 = scmp.ge.s32.totalorder %s20, 4
      %s30 = sphi 0, %s32
      %s33 = sphi 0, %s30
      %s34 = sphi 0, %s33
      %s50 = sphi 0, %s34
      %s54 = sphi 0, %s54
      %s56 = sphi 0, %s54
      %s57 = sphi 0, %s56
      %s71 = sphi 0, %s57
      %s75 = sphi 0, %s75
      %s77 = sphi 0, %s75
      %s78 = sphi 0, %s77
      %s92 = sphi 0, %s78
      %s96 = sphi 0, %s96
      %s98 = sphi 0, %s96
      %s99 = sphi 0, %s98
      %s113 = sphi 0, %s99
      %s117 = sphi 0, %s117
      %s119 = sphi 0, %s117
      %s120 = sphi 0, %s119
      %s134 = sphi 0, %s120
      %s138 = sphi 0, %s138
      %s140 = sphi 0, %s138
      %s141 = sphi 0, %s140
      %s155 = sphi 0, %s141
      %s161 = sphi 0, %s163
      %s164 = sphi 0, %s161
      %s165 = sphi 0, %s164
      %s181 = sphi 0, %s165
    $region4: #{tpu_custom_call.1} parent=1 // loop_header_branch
      %23 = sbr.rel (%p21) target = $region8
    $region5: #{tpu_custom_call.1} parent=1 // loop_body
      %s25 = ssub.s32 %s20, 1
      %s26 = ssub.s32 %s20, 2
      %s27 = sadd.s32 %s20, 1
      %s28 = ssub.s32 %s20, %s27
      %p29 = scmp.eq.s32.totalorder %s28, 0
      %s31 = sadd.s32 %s30, 1
      %s32 = scalar_select %p29, %s30, %s31
      %p35 = pneg %p29
      %p36 = scmp.eq.s32.totalorder %s20, 1
      %p37 = por %p35, %p36
      %p38 = scmp.ne.s32.totalorder %s30, %s33
      %p39 = scmp.eq.s32.totalorder %s20, 0
      %p40 = por %p38, %p39
      %p41 = scmp.ne.s32.totalorder %s30, %s33
      %p42 = scmp.eq.s32.totalorder %s25, 1
      %p43 = por %p41, %p42
      %p44 = scmp.ne.s32.totalorder %s33, %s34
      %p45 = scmp.eq.s32.totalorder %s25, 0
      %p46 = por %p44, %p45
      %p47 = scmp.ne.s32.totalorder %s33, %s34
      %p48 = scmp.eq.s32.totalorder %s26, 1
      %p49 = por %p47, %p48
      %p51 = scmp.ne.s32.totalorder %s34, %s50
      %p52 = scmp.eq.s32.totalorder %s26, 0
      %p53 = por %p51, %p52
      %s55 = sadd.s32 %s54, 1
      %p58 = scmp.eq.s32.totalorder %s20, 1
      %p59 = scmp.ne.s32.totalorder %s54, %s56
      %p60 = scmp.eq.s32.totalorder %s20, 0
      %p61 = por %p59, %p60
      %p62 = scmp.ne.s32.totalorder %s54, %s56
      %p63 = scmp.eq.s32.totalorder %s25, 1
      %p64 = por %p62, %p63
      %p65 = scmp.ne.s32.totalorder %s56, %s57
      %p66 = scmp.eq.s32.totalorder %s25, 0
      %p67 = por %p65, %p66
      %p68 = scmp.ne.s32.totalorder %s56, %s57
      %p69 = scmp.eq.s32.totalorder %s26, 1
      %p70 = por %p68, %p69
      %p72 = scmp.ne.s32.totalorder %s57, %s71
      %p73 = scmp.eq.s32.totalorder %s26, 0
      %p74 = por %p72, %p73
      %s76 = sadd.s32 %s75, 1
      %p79 = scmp.eq.s32.totalorder %s20, 1
      %p80 = scmp.ne.s32.totalorder %s75, %s77
      %p81 = scmp.eq.s32.totalorder %s20, 0
      %p82 = por %p80, %p81
      %p83 = scmp.ne.s32.totalorder %s75, %s77
      %p84 = scmp.eq.s32.totalorder %s25, 1
      %p85 = por %p83, %p84
      %p86 = scmp.ne.s32.totalorder %s77, %s78
      %p87 = scmp.eq.s32.totalorder %s25, 0
      %p88 = por %p86, %p87
      %p89 = scmp.ne.s32.totalorder %s77, %s78
      %p90 = scmp.eq.s32.totalorder %s26, 1
      %p91 = por %p89, %p90
      %p93 = scmp.ne.s32.totalorder %s78, %s92
      %p94 = scmp.eq.s32.totalorder %s26, 0
      %p95 = por %p93, %p94
      %s97 = sadd.s32 %s96, 1
      %p100 = scmp.eq.s32.totalorder %s20, 1
      %p101 = scmp.ne.s32.totalorder %s96, %s98
      %p102 = scmp.eq.s32.totalorder %s20, 0
      %p103 = por %p101, %p102
      %p104 = scmp.ne.s32.totalorder %s96, %s98
      %p105 = scmp.eq.s32.totalorder %s25, 1
      %p106 = por %p104, %p105
      %p107 = scmp.ne.s32.totalorder %s98, %s99
      %p108 = scmp.eq.s32.totalorder %s25, 0
      %p109 = por %p107, %p108
      %p110 = scmp.ne.s32.totalorder %s98, %s99
      %p111 = scmp.eq.s32.totalorder %s26, 1
      %p112 = por %p110, %p111
      %p114 = scmp.ne.s32.totalorder %s99, %s113
      %p115 = scmp.eq.s32.totalorder %s26, 0
      %p116 = por %p114, %p115
      %s118 = sadd.s32 %s117, 1
      %p121 = scmp.eq.s32.totalorder %s20, 1
      %p122 = scmp.ne.s32.totalorder %s117, %s119
      %p123 = scmp.eq.s32.totalorder %s20, 0
      %p124 = por %p122, %p123
      %p125 = scmp.ne.s32.totalorder %s117, %s119
      %p126 = scmp.eq.s32.totalorder %s25, 1
      %p127 = por %p125, %p126
      %p128 = scmp.ne.s32.totalorder %s119, %s120
      %p129 = scmp.eq.s32.totalorder %s25, 0
      %p130 = por %p128, %p129
      %p131 = scmp.ne.s32.totalorder %s119, %s120
      %p132 = scmp.eq.s32.totalorder %s26, 1
      %p133 = por %p131, %p132
      %p135 = scmp.ne.s32.totalorder %s120, %s134
      %p136 = scmp.eq.s32.totalorder %s26, 0
      %p137 = por %p135, %p136
      %s139 = sadd.s32 %s138, 1
      %p142 = scmp.eq.s32.totalorder %s20, 1
      %p143 = scmp.ne.s32.totalorder %s138, %s140
      %p144 = scmp.eq.s32.totalorder %s20, 0
      %p145 = por %p143, %p144
      %p146 = scmp.ne.s32.totalorder %s138, %s140
      %p147 = scmp.eq.s32.totalorder %s25, 1
      %p148 = por %p146, %p147
      %p149 = scmp.ne.s32.totalorder %s140, %s141
      %p150 = scmp.eq.s32.totalorder %s25, 0
      %p151 = por %p149, %p150
      %p152 = scmp.ne.s32.totalorder %s140, %s141
      %p153 = scmp.eq.s32.totalorder %s26, 1
      %p154 = por %p152, %p153
      %p156 = scmp.ne.s32.totalorder %s141, %s155
      %p157 = scmp.eq.s32.totalorder %s26, 0
      %p158 = por %p156, %p157
      %s159 = ssub.s32 %s20, %s27
      %p160 = scmp.eq.s32.totalorder %s159, 0
      %s162 = sadd.s32 %s161, 1
      %s163 = scalar_select %p160, %s161, %s162
      %p166 = pneg %p160
      %p167 = scmp.eq.s32.totalorder %s20, 1
      %p168 = por %p166, %p167
      %p169 = scmp.ne.s32.totalorder %s161, %s164
      %p170 = scmp.eq.s32.totalorder %s20, 0
      %p171 = por %p169, %p170
      %p172 = scmp.ne.s32.totalorder %s161, %s164
      %p173 = scmp.eq.s32.totalorder %s25, 1
      %p174 = por %p172, %p173
      %p175 = scmp.ne.s32.totalorder %s164, %s165
      %p176 = scmp.eq.s32.totalorder %s25, 0
      %p177 = por %p175, %p176
      %p178 = scmp.ne.s32.totalorder %s164, %s165
      %p179 = scmp.eq.s32.totalorder %s26, 1
      %p180 = por %p178, %p179
      %p182 = scmp.ne.s32.totalorder %s165, %s181
      %p183 = scmp.eq.s32.totalorder %s26, 0
      %p184 = por %p182, %p183
      %p185 = scmp.le.s32.totalorder 1, %s20
      %p186 = scmp.lt.s32.totalorder %s20, 3
      %p187 = pnand %p185, %p186
      %p188 = pneg %p187
      // Predicated region
      $region9: #{tpu_custom_call.1} parent=5 // pred_check
        _
      $region10: #{tpu_custom_call.1} parent=5 // pred_check_branch
        %190 = sbr.rel (%p187) target = $region12
      $region11: #{tpu_custom_call.1} parent=5 // pred_region
        %s191 = ssub.s32 %s20, 1
        // Predicated region
        $region13: #{tpu_custom_call.1} parent=11 // pred_check
          %p192 = pneg %p67
        $region14: #{tpu_custom_call.1} parent=11 // pred_check_branch
          %194 = sbr.rel (%p192) target = $region16
        $region15: #{tpu_custom_call.1} parent=11 // pred_region
          %196 = vsyncadd [#allocation6], 0
          %s197 = sshll.u32 %s1, 4
          %s198 = int_to_ptr.hbm [resolvable:$true] %s197
          %s199 = sshll.u32 [#allocation5], 4
          %s200 = int_to_ptr.vmem [resolvable:$true] %s199
          %205 = dma.hbm_to_vmem [thread:$0]  %s198, 16384, %s200, [#allocation6], 512, 512, 32
        $region16: #{tpu_custom_call.1} parent=11 // pred_fallthru
          _
        // Predicated region
        $region17: #{tpu_custom_call.1} parent=11 // pred_check
          %p206 = pneg %p88
        $region18: #{tpu_custom_call.1} parent=11 // pred_check_branch
          %208 = sbr.rel (%p206) target = $region20
        $region19: #{tpu_custom_call.1} parent=11 // pred_region
          %210 = vsyncadd [#allocation6], 0
          %s212 = sshll.u32 %s2, 4
          %s213 = int_to_ptr.hbm [resolvable:$true] %s212
          %s214 = sshll.u32 [#allocation7], 4
          %s215 = int_to_ptr.vmem [resolvable:$true] %s214
          %217 = dma.hbm_to_vmem [thread:$0]  %s213, 512, %s215, [#allocation6]
        $region20: #{tpu_custom_call.1} parent=11 // pred_fallthru
          _
        // Predicated region
        $region21: #{tpu_custom_call.1} parent=11 // pred_check
          %p218 = pneg %p109
        $region22: #{tpu_custom_call.1} parent=11 // pred_check_branch
          %220 = sbr.rel (%p218) target = $region24
        $region23: #{tpu_custom_call.1} parent=11 // pred_region
          _
        $region24: #{tpu_custom_call.1} parent=11 // pred_fallthru
          _
        // Predicated region
        $region25: #{tpu_custom_call.1} parent=11 // pred_check
          %p221 = pneg %p130
        $region26: #{tpu_custom_call.1} parent=11 // pred_check_branch
          %223 = sbr.rel (%p221) target = $region28
        $region27: #{tpu_custom_call.1} parent=11 // pred_region
          %225 = vsyncadd [#allocation9], 0
          %s226 = sshll.u32 %s4, 4
          %s227 = int_to_ptr.hbm [resolvable:$true] %s226
          %s228 = sshll.u32 [#allocation8], 4
          %s229 = int_to_ptr.vmem [resolvable:$true] %s228
          %234 = dma.hbm_to_vmem [thread:$0]  %s227, 16384, %s229, [#allocation9], 256, 256, 16
        $region28: #{tpu_custom_call.1} parent=11 // pred_fallthru
          _
        // Predicated region
        $region29: #{tpu_custom_call.1} parent=11 // pred_check
          %p235 = pneg %p151
        $region30: #{tpu_custom_call.1} parent=11 // pred_check_branch
          %237 = sbr.rel (%p235) target = $region32
        $region31: #{tpu_custom_call.1} parent=11 // pred_region
          _
        $region32: #{tpu_custom_call.1} parent=11 // pred_fallthru
          _
      $region12: #{tpu_custom_call.1} parent=5 // pred_fallthru
        _
      %p238 = scmp.lt.s32.totalorder %s20, 2
      // Predicated region
      $region33: #{tpu_custom_call.1} parent=5 // pred_check
        %p239 = pneg %p238
      $region34: #{tpu_custom_call.1} parent=5 // pred_check_branch
        %241 = sbr.rel (%p239) target = $region36
      $region35: #{tpu_custom_call.1} parent=5 // pred_region
        // Predicated region
        $region37: #{tpu_custom_call.1} parent=35 // pred_check
          %p242 = pneg %p40
        $region38: #{tpu_custom_call.1} parent=35 // pred_check_branch
          %244 = sbr.rel (%p242) target = $region40
        $region39: #{tpu_custom_call.1} parent=35 // pred_region
          %s245 = sand.u32 %s30, 1
          %s246 = scalar_lea.sflag [#allocation3], %s245
          %s247 = sand.u32 %s30, 1
          %s248 = smul.addr %s247, 8
          %s249 = scalar_lea.vmem [#allocation2], %s248
          %251 = vsyncadd %s246, 0
          %s252 = smul.addr %s20, 2
          %s253 = smul.addr %s252, 4
          %s254 = scalar_lea.hbm %s0, %s253
          %s256 = sshll.u32 %s254, 4
          %s257 = int_to_ptr.hbm [resolvable:$true] %s256
          %s258 = sshll.u32 %s249, 4
          %s259 = int_to_ptr.vmem [resolvable:$true] %s258
          %261 = dma.hbm_to_vmem [thread:$0]  %s257, 128, %s259, %s246
        $region40: #{tpu_custom_call.1} parent=35 // pred_fallthru
          _
      $region36: #{tpu_custom_call.1} parent=5 // pred_fallthru
        _
      %p262 = scmp.le.s32.totalorder 1, %s20
      %p263 = scmp.lt.s32.totalorder %s20, 3
      %p264 = pnand %p262, %p263
      %p265 = pneg %p264
      // Predicated region
      $region41: #{tpu_custom_call.1} parent=5 // pred_check
        _
      $region42: #{tpu_custom_call.1} parent=5 // pred_check_branch
        %267 = sbr.rel (%p264) target = $region44
      $region43: #{tpu_custom_call.1} parent=5 // pred_region
        %s268 = ssub.s32 %s20, 1
        %s269 = sand.u32 %s33, 1
        %s270 = scalar_lea.sflag [#allocation3], %s269
        %s271 = sand.u32 %s33, 1
        %s272 = smul.addr %s271, 8
        %s273 = scalar_lea.vmem [#allocation2], %s272
        // Predicated region
        $region45: #{tpu_custom_call.1} parent=43 // pred_check
          %p274 = pneg %p46
        $region46: #{tpu_custom_call.1} parent=43 // pred_check_branch
          %276 = sbr.rel (%p274) target = $region48
        $region47: #{tpu_custom_call.1} parent=43 // pred_region
          %278 = dma.done %s270, 128
        $region48: #{tpu_custom_call.1} parent=43 // pred_fallthru
          _
        // Predicated region
        $region49: #{tpu_custom_call.1} parent=43 // pred_check
          %p279 = pneg %p67
        $region50: #{tpu_custom_call.1} parent=43 // pred_check_branch
          %281 = sbr.rel (%p279) target = $region52
        $region51: #{tpu_custom_call.1} parent=43 // pred_region
          %283 = dma.done [#allocation6], 16384
        $region52: #{tpu_custom_call.1} parent=43 // pred_fallthru
          _
        // Predicated region
        $region53: #{tpu_custom_call.1} parent=43 // pred_check
          %p284 = pneg %p88
        $region54: #{tpu_custom_call.1} parent=43 // pred_check_branch
          %286 = sbr.rel (%p284) target = $region56
        $region55: #{tpu_custom_call.1} parent=43 // pred_region
          %288 = dma.done [#allocation6], 512
        $region56: #{tpu_custom_call.1} parent=43 // pred_fallthru
          _
        // Predicated region
        $region57: #{tpu_custom_call.1} parent=43 // pred_check
          %p289 = pneg %p130
        $region58: #{tpu_custom_call.1} parent=43 // pred_check_branch
          %291 = sbr.rel (%p289) target = $region60
        $region59: #{tpu_custom_call.1} parent=43 // pred_region
          %293 = dma.done [#allocation9], 16384
        $region60: #{tpu_custom_call.1} parent=43 // pred_fallthru
          _
        %s294 = sand.u32 %s33, 1
        %s295 = scalar_lea.sflag [#allocation3], %s294
        %s296 = sand.u32 %s33, 1
        %s297 = smul.addr %s296, 8
        %s298 = scalar_lea.vmem [#allocation2], %s297
        %p299 = pneg %p46
        %p300 = pneg %p43
        %p301 = pneg %p67
        %p302 = pneg %p64
        %p303 = pneg %p88
        %p304 = pneg %p85
        %p305 = pneg %p109
        %p306 = pneg %p106
        %p307 = pneg %p130
        %p308 = pneg %p127
        %p309 = pneg %p151
        %p310 = pneg %p148
        %p311 = pneg %p177
        %p312 = pneg %p174
        %s313 = sand.u32 %s164, 1
        %s314 = scalar_lea.sflag [#allocation4], %s313
        %s315 = sand.u32 %s164, 1
        %s316 = smul.addr %s315, 16
        %s317 = scalar_lea.vmem [#allocation10], %s316
        %v318 = vld [vmem:[%s273] sm:$0xff]
        %v319 = vld [vmem:[#allocation5] sm:$0xff]
        %v320 = vld [vmem:[#allocation5 + $0x8] sm:$0xff]
        %v321 = vld [vmem:[#allocation5 + $0x10] sm:$0xff]
        %v322 = vld [vmem:[#allocation5 + $0x18] sm:$0xff]
        %v323 = vld [vmem:[#allocation5 + $0x20] sm:$0xff]
        %v324 = vld [vmem:[#allocation5 + $0x28] sm:$0xff]
        %v325 = vld [vmem:[#allocation5 + $0x30] sm:$0xff]
        %v326 = vld [vmem:[#allocation5 + $0x38] sm:$0xff]
        %v327 = vld [vmem:[#allocation5 + $0x40] sm:$0xff]
        %v328 = vld [vmem:[#allocation5 + $0x48] sm:$0xff]
        %v329 = vld [vmem:[#allocation5 + $0x50] sm:$0xff]
        %v330 = vld [vmem:[#allocation5 + $0x58] sm:$0xff]
        %v331 = vld [vmem:[#allocation5 + $0x60] sm:$0xff]
        %v332 = vld [vmem:[#allocation5 + $0x68] sm:$0xff]
        %v333 = vld [vmem:[#allocation5 + $0x70] sm:$0xff]
        %v334 = vld [vmem:[#allocation5 + $0x78] sm:$0xff]
        %v335 = vld [vmem:[#allocation5 + $0x80] sm:$0xff]
        %v336 = vld [vmem:[#allocation5 + $0x88] sm:$0xff]
        %v337 = vld [vmem:[#allocation5 + $0x90] sm:$0xff]
        %v338 = vld [vmem:[#allocation5 + $0x98] sm:$0xff]
        %v339 = vld [vmem:[#allocation5 + $0xa0] sm:$0xff]
        %v340 = vld [vmem:[#allocation5 + $0xa8] sm:$0xff]
        %v341 = vld [vmem:[#allocation5 + $0xb0] sm:$0xff]
        %v342 = vld [vmem:[#allocation5 + $0xb8] sm:$0xff]
        %v343 = vld [vmem:[#allocation5 + $0xc0] sm:$0xff]
        %v344 = vld [vmem:[#allocation5 + $0xc8] sm:$0xff]
        %v345 = vld [vmem:[#allocation5 + $0xd0] sm:$0xff]
        %v346 = vld [vmem:[#allocation5 + $0xd8] sm:$0xff]
        %v347 = vld [vmem:[#allocation5 + $0xe0] sm:$0xff]
        %v348 = vld [vmem:[#allocation5 + $0xe8] sm:$0xff]
        %v349 = vld [vmem:[#allocation5 + $0xf0] sm:$0xff]
        %v350 = vld [vmem:[#allocation5 + $0xf8] sm:$0xff]
        %v351 = vld [vmem:[#allocation5 + $0x100] sm:$0xff]
        %v352 = vld [vmem:[#allocation5 + $0x108] sm:$0xff]
        %v353 = vld [vmem:[#allocation5 + $0x110] sm:$0xff]
        %v354 = vld [vmem:[#allocation5 + $0x118] sm:$0xff]
        %v355 = vld [vmem:[#allocation5 + $0x120] sm:$0xff]
        %v356 = vld [vmem:[#allocation5 + $0x128] sm:$0xff]
        %v357 = vld [vmem:[#allocation5 + $0x130] sm:$0xff]
        %v358 = vld [vmem:[#allocation5 + $0x138] sm:$0xff]
        %v359 = vld [vmem:[#allocation5 + $0x140] sm:$0xff]
        %v360 = vld [vmem:[#allocation5 + $0x148] sm:$0xff]
        %v361 = vld [vmem:[#allocation5 + $0x150] sm:$0xff]
        %v362 = vld [vmem:[#allocation5 + $0x158] sm:$0xff]
        %v363 = vld [vmem:[#allocation5 + $0x160] sm:$0xff]
        %v364 = vld [vmem:[#allocation5 + $0x168] sm:$0xff]
        %v365 = vld [vmem:[#allocation5 + $0x170] sm:$0xff]
        %v366 = vld [vmem:[#allocation5 + $0x178] sm:$0xff]
        %v367 = vld [vmem:[#allocation5 + $0x180] sm:$0xff]
        %v368 = vld [vmem:[#allocation5 + $0x188] sm:$0xff]
        %v369 = vld [vmem:[#allocation5 + $0x190] sm:$0xff]
        %v370 = vld [vmem:[#allocation5 + $0x198] sm:$0xff]
        %v371 = vld [vmem:[#allocation5 + $0x1a0] sm:$0xff]
        %v372 = vld [vmem:[#allocation5 + $0x1a8] sm:$0xff]
        %v373 = vld [vmem:[#allocation5 + $0x1b0] sm:$0xff]
        %v374 = vld [vmem:[#allocation5 + $0x1b8] sm:$0xff]
        %v375 = vld [vmem:[#allocation5 + $0x1c0] sm:$0xff]
        %v376 = vld [vmem:[#allocation5 + $0x1c8] sm:$0xff]
        %v377 = vld [vmem:[#allocation5 + $0x1d0] sm:$0xff]
        %v378 = vld [vmem:[#allocation5 + $0x1d8] sm:$0xff]
        %v379 = vld [vmem:[#allocation5 + $0x1e0] sm:$0xff]
        %v380 = vld [vmem:[#allocation5 + $0x1e8] sm:$0xff]
        %v381 = vld [vmem:[#allocation5 + $0x1f0] sm:$0xff]
        %v382 = vld [vmem:[#allocation5 + $0x1f8] sm:$0xff]
        %v383 = vld [vmem:[#allocation5 + $0x200] sm:$0xff]
        %v384 = vld [vmem:[#allocation5 + $0x208] sm:$0xff]
        %v385 = vld [vmem:[#allocation5 + $0x210] sm:$0xff]
        %v386 = vld [vmem:[#allocation5 + $0x218] sm:$0xff]
        %v387 = vld [vmem:[#allocation5 + $0x220] sm:$0xff]
        %v388 = vld [vmem:[#allocation5 + $0x228] sm:$0xff]
        %v389 = vld [vmem:[#allocation5 + $0x230] sm:$0xff]
        %v390 = vld [vmem:[#allocation5 + $0x238] sm:$0xff]
        %v391 = vld [vmem:[#allocation5 + $0x240] sm:$0xff]
        %v392 = vld [vmem:[#allocation5 + $0x248] sm:$0xff]
        %v393 = vld [vmem:[#allocation5 + $0x250] sm:$0xff]
        %v394 = vld [vmem:[#allocation5 + $0x258] sm:$0xff]
        %v395 = vld [vmem:[#allocation5 + $0x260] sm:$0xff]
        %v396 = vld [vmem:[#allocation5 + $0x268] sm:$0xff]
        %v397 = vld [vmem:[#allocation5 + $0x270] sm:$0xff]
        %v398 = vld [vmem:[#allocation5 + $0x278] sm:$0xff]
        %v399 = vld [vmem:[#allocation5 + $0x280] sm:$0xff]
        %v400 = vld [vmem:[#allocation5 + $0x288] sm:$0xff]
        %v401 = vld [vmem:[#allocation5 + $0x290] sm:$0xff]
        %v402 = vld [vmem:[#allocation5 + $0x298] sm:$0xff]
        %v403 = vld [vmem:[#allocation5 + $0x2a0] sm:$0xff]
        %v404 = vld [vmem:[#allocation5 + $0x2a8] sm:$0xff]
        %v405 = vld [vmem:[#allocation5 + $0x2b0] sm:$0xff]
        %v406 = vld [vmem:[#allocation5 + $0x2b8] sm:$0xff]
        %v407 = vld [vmem:[#allocation5 + $0x2c0] sm:$0xff]
        %v408 = vld [vmem:[#allocation5 + $0x2c8] sm:$0xff]
        %v409 = vld [vmem:[#allocation5 + $0x2d0] sm:$0xff]
        %v410 = vld [vmem:[#allocation5 + $0x2d8] sm:$0xff]
        %v411 = vld [vmem:[#allocation5 + $0x2e0] sm:$0xff]
        %v412 = vld [vmem:[#allocation5 + $0x2e8] sm:$0xff]
        %v413 = vld [vmem:[#allocation5 + $0x2f0] sm:$0xff]
        %v414 = vld [vmem:[#allocation5 + $0x2f8] sm:$0xff]
        %v415 = vld [vmem:[#allocation5 + $0x300] sm:$0xff]
        %v416 = vld [vmem:[#allocation5 + $0x308] sm:$0xff]
        %v417 = vld [vmem:[#allocation5 + $0x310] sm:$0xff]
        %v418 = vld [vmem:[#allocation5 + $0x318] sm:$0xff]
        %v419 = vld [vmem:[#allocation5 + $0x320] sm:$0xff]
        %v420 = vld [vmem:[#allocation5 + $0x328] sm:$0xff]
        %v421 = vld [vmem:[#allocation5 + $0x330] sm:$0xff]
        %v422 = vld [vmem:[#allocation5 + $0x338] sm:$0xff]
        %v423 = vld [vmem:[#allocation5 + $0x340] sm:$0xff]
        %v424 = vld [vmem:[#allocation5 + $0x348] sm:$0xff]
        %v425 = vld [vmem:[#allocation5 + $0x350] sm:$0xff]
        %v426 = vld [vmem:[#allocation5 + $0x358] sm:$0xff]
        %v427 = vld [vmem:[#allocation5 + $0x360] sm:$0xff]
        %v428 = vld [vmem:[#allocation5 + $0x368] sm:$0xff]
        %v429 = vld [vmem:[#allocation5 + $0x370] sm:$0xff]
        %v430 = vld [vmem:[#allocation5 + $0x378] sm:$0xff]
        %v431 = vld [vmem:[#allocation5 + $0x380] sm:$0xff]
        %v432 = vld [vmem:[#allocation5 + $0x388] sm:$0xff]
        %v433 = vld [vmem:[#allocation5 + $0x390] sm:$0xff]
        %v434 = vld [vmem:[#allocation5 + $0x398] sm:$0xff]
        %v435 = vld [vmem:[#allocation5 + $0x3a0] sm:$0xff]
        %v436 = vld [vmem:[#allocation5 + $0x3a8] sm:$0xff]
        %v437 = vld [vmem:[#allocation5 + $0x3b0] sm:$0xff]
        %v438 = vld [vmem:[#allocation5 + $0x3b8] sm:$0xff]
        %v439 = vld [vmem:[#allocation5 + $0x3c0] sm:$0xff]
        %v440 = vld [vmem:[#allocation5 + $0x3c8] sm:$0xff]
        %v441 = vld [vmem:[#allocation5 + $0x3d0] sm:$0xff]
        %v442 = vld [vmem:[#allocation5 + $0x3d8] sm:$0xff]
        %v443 = vld [vmem:[#allocation5 + $0x3e0] sm:$0xff]
        %v444 = vld [vmem:[#allocation5 + $0x3e8] sm:$0xff]
        %v445 = vld [vmem:[#allocation5 + $0x3f0] sm:$0xff]
        %v446 = vld [vmem:[#allocation5 + $0x3f8] sm:$0xff]
        %448 = vst [vmem:[#allocation1] ss:$2 sm:$0xff] %v318
        %v449 = vld.sshfl [vmem:[#allocation1] sm:$0xff pattern:$0x75316420]
        %v450 = vld.sshfl [vmem:[#allocation1 + $0x8] sm:$0xff pattern:$0x75316420]
        %453 = vmatpush.msra.mxu0 %v379
        %454 = vmatpush.msra.mxu0 %v375
        %455 = vmatpush.msra.mxu0 %v371
        %456 = vmatpush.msra.mxu0 %v367
        %457 = vmatpush.msra.mxu0 %v363
        %458 = vmatpush.msra.mxu0 %v359
        %459 = vmatpush.msra.mxu0 %v355
        %460 = vmatpush.msra.mxu0 %v351
        %461 = vmatpush.msra.mxu0 %v347
        %462 = vmatpush.msra.mxu0 %v343
        %463 = vmatpush.msra.mxu0 %v339
        %464 = vmatpush.msra.mxu0 %v335
        %465 = vmatpush.msra.mxu0 %v331
        %466 = vmatpush.msra.mxu0 %v327
        %467 = vmatpush.msra.mxu0 %v323
        %468 = vmatpush.msra.mxu0 %v319
        %469 = vmatmul.f32.gmra.mxu0 %v449
        %v470 = vpop.f32.mrf.mxu0
        %v471 = vadd.f32 0.0, %v470
        %472 = vdwg.mxu0
        %473 = vmatpush.msra.mxu0 %v443
        %474 = vmatpush.msra.mxu0 %v439
        %475 = vmatpush.msra.mxu0 %v435
        %476 = vmatpush.msra.mxu0 %v431
        %477 = vmatpush.msra.mxu0 %v427
        %478 = vmatpush.msra.mxu0 %v423
        %479 = vmatpush.msra.mxu0 %v419
        %480 = vmatpush.msra.mxu0 %v415
        %481 = vmatpush.msra.mxu0 %v411
        %482 = vmatpush.msra.mxu0 %v407
        %483 = vmatpush.msra.mxu0 %v403
        %484 = vmatpush.msra.mxu0 %v399
        %485 = vmatpush.msra.mxu0 %v395
        %486 = vmatpush.msra.mxu0 %v391
        %487 = vmatpush.msra.mxu0 %v387
        %488 = vmatpush.msra.mxu0 %v383
        %489 = vmatmul.f32.gmra.mxu0 %v450
        %v490 = vpop.f32.mrf.mxu0
        %v491 = vadd.f32 %v471, %v490
        %492 = vdwg.mxu0
        %493 = vmatpush.msra.mxu0 %v380
        %494 = vmatpush.msra.mxu0 %v376
        %495 = vmatpush.msra.mxu0 %v372
        %496 = vmatpush.msra.mxu0 %v368
        %497 = vmatpush.msra.mxu0 %v364
        %498 = vmatpush.msra.mxu0 %v360
        %499 = vmatpush.msra.mxu0 %v356
        %500 = vmatpush.msra.mxu0 %v352
        %501 = vmatpush.msra.mxu0 %v348
        %502 = vmatpush.msra.mxu0 %v344
        %503 = vmatpush.msra.mxu0 %v340
        %504 = vmatpush.msra.mxu0 %v336
        %505 = vmatpush.msra.mxu0 %v332
        %506 = vmatpush.msra.mxu0 %v328
        %507 = vmatpush.msra.mxu0 %v324
        %508 = vmatpush.msra.mxu0 %v320
        %509 = vmatmul.f32.gmra.mxu0 %v449
        %v510 = vpop.f32.mrf.mxu0
        %v511 = vadd.f32 0.0, %v510
        %512 = vdwg.mxu0
        %513 = vmatpush.msra.mxu0 %v444
        %514 = vmatpush.msra.mxu0 %v440
        %515 = vmatpush.msra.mxu0 %v436
        %516 = vmatpush.msra.mxu0 %v432
        %517 = vmatpush.msra.mxu0 %v428
        %518 = vmatpush.msra.mxu0 %v424
        %519 = vmatpush.msra.mxu0 %v420
        %520 = vmatpush.msra.mxu0 %v416
        %521 = vmatpush.msra.mxu0 %v412
        %522 = vmatpush.msra.mxu0 %v408
        %523 = vmatpush.msra.mxu0 %v404
        %524 = vmatpush.msra.mxu0 %v400
        %525 = vmatpush.msra.mxu0 %v396
        %526 = vmatpush.msra.mxu0 %v392
        %527 = vmatpush.msra.mxu0 %v388
        %528 = vmatpush.msra.mxu0 %v384
        %529 = vmatmul.f32.gmra.mxu0 %v450
        %v530 = vpop.f32.mrf.mxu0
        %v531 = vadd.f32 %v511, %v530
        %532 = vdwg.mxu0
        %533 = vmatpush.msra.mxu0 %v381
        %534 = vmatpush.msra.mxu0 %v377
        %535 = vmatpush.msra.mxu0 %v373
        %536 = vmatpush.msra.mxu0 %v369
        %537 = vmatpush.msra.mxu0 %v365
        %538 = vmatpush.msra.mxu0 %v361
        %539 = vmatpush.msra.mxu0 %v357
        %540 = vmatpush.msra.mxu0 %v353
        %541 = vmatpush.msra.mxu0 %v349
        %542 = vmatpush.msra.mxu0 %v345
        %543 = vmatpush.msra.mxu0 %v341
        %544 = vmatpush.msra.mxu0 %v337
        %545 = vmatpush.msra.mxu0 %v333
        %546 = vmatpush.msra.mxu0 %v329
        %547 = vmatpush.msra.mxu0 %v325
        %548 = vmatpush.msra.mxu0 %v321
        %549 = vmatmul.f32.gmra.mxu0 %v449
        %v550 = vpop.f32.mrf.mxu0
        %v551 = vadd.f32 0.0, %v550
        %552 = vdwg.mxu0
        %553 = vmatpush.msra.mxu0 %v445
        %554 = vmatpush.msra.mxu0 %v441
        %555 = vmatpush.msra.mxu0 %v437
        %556 = vmatpush.msra.mxu0 %v433
        %557 = vmatpush.msra.mxu0 %v429
        %558 = vmatpush.msra.mxu0 %v425
        %559 = vmatpush.msra.mxu0 %v421
        %560 = vmatpush.msra.mxu0 %v417
        %561 = vmatpush.msra.mxu0 %v413
        %562 = vmatpush.msra.mxu0 %v409
        %563 = vmatpush.msra.mxu0 %v405
        %564 = vmatpush.msra.mxu0 %v401
        %565 = vmatpush.msra.mxu0 %v397
        %566 = vmatpush.msra.mxu0 %v393
        %567 = vmatpush.msra.mxu0 %v389
        %568 = vmatpush.msra.mxu0 %v385
        %569 = vmatmul.f32.gmra.mxu0 %v450
        %v570 = vpop.f32.mrf.mxu0
        %v571 = vadd.f32 %v551, %v570
        %572 = vdwg.mxu0
        %573 = vmatpush.msra.mxu0 %v382
        %574 = vmatpush.msra.mxu0 %v378
        %575 = vmatpush.msra.mxu0 %v374
        %576 = vmatpush.msra.mxu0 %v370
        %577 = vmatpush.msra.mxu0 %v366
        %578 = vmatpush.msra.mxu0 %v362
        %579 = vmatpush.msra.mxu0 %v358
        %580 = vmatpush.msra.mxu0 %v354
        %581 = vmatpush.msra.mxu0 %v350
        %582 = vmatpush.msra.mxu0 %v346
        %583 = vmatpush.msra.mxu0 %v342
        %584 = vmatpush.msra.mxu0 %v338
        %585 = vmatpush.msra.mxu0 %v334
        %586 = vmatpush.msra.mxu0 %v330
        %587 = vmatpush.msra.mxu0 %v326
        %588 = vmatpush.msra.mxu0 %v322
        %589 = vmatmul.f32.gmra.mxu0 %v449
        %v590 = vpop.f32.mrf.mxu0
        %v591 = vadd.f32 0.0, %v590
        %592 = vdwg.mxu0
        %593 = vmatpush.msra.mxu0 %v446
        %594 = vmatpush.msra.mxu0 %v442
        %595 = vmatpush.msra.mxu0 %v438
        %596 = vmatpush.msra.mxu0 %v434
        %597 = vmatpush.msra.mxu0 %v430
        %598 = vmatpush.msra.mxu0 %v426
        %599 = vmatpush.msra.mxu0 %v422
        %600 = vmatpush.msra.mxu0 %v418
        %601 = vmatpush.msra.mxu0 %v414
        %602 = vmatpush.msra.mxu0 %v410
        %603 = vmatpush.msra.mxu0 %v406
        %604 = vmatpush.msra.mxu0 %v402
        %605 = vmatpush.msra.mxu0 %v398
        %606 = vmatpush.msra.mxu0 %v394
        %607 = vmatpush.msra.mxu0 %v390
        %608 = vmatpush.msra.mxu0 %v386
        %609 = vmatmul.f32.gmra.mxu0 %v450
        %v610 = vpop.f32.mrf.mxu0
        %v611 = vadd.f32 %v591, %v610
        %612 = vdwg.mxu0
        %v613 = vld [vmem:[#allocation7] ss:$8 sm:$0xf]
        %v615 = vperm.slane %v613, 0
        %v616 = vperm.slane %v613, 1
        %v617 = vperm.slane %v613, 2
        %v618 = vperm.slane %v613, 3
        %v623 = vmul.f32 %v615, %v571
        %v624 = vmul.f32 %v616, %v611
        %v625 = vmul.f32 %v617, %v491
        %v626 = vmul.f32 %v618, %v531
        %s627 = scalar_lea.vmem [#allocation7], 1
        %v628 = vld [vmem:[%s627] ss:$8 sm:$0xf]
        %v630 = vperm.slane %v628, 0
        %v631 = vperm.slane %v628, 1
        %v632 = vperm.slane %v628, 2
        %v633 = vperm.slane %v628, 3
        %v638 = vmul.f32 %v630, %v571
        %v639 = vmul.f32 %v631, %v611
        %v640 = vmul.f32 %v632, %v491
        %v641 = vmul.f32 %v633, %v531
        %s642 = scalar_lea.vmem [#allocation7], 2
        %v643 = vld [vmem:[%s642] ss:$8 sm:$0xf]
        %v645 = vperm.slane %v643, 0
        %v646 = vperm.slane %v643, 1
        %v647 = vperm.slane %v643, 2
        %v648 = vperm.slane %v643, 3
        %v653 = vmul.f32 %v645, %v491
        %v654 = vmul.f32 %v646, %v531
        %v655 = vmul.f32 %v647, %v571
        %v656 = vmul.f32 %v648, %v611
        %s657 = scalar_lea.vmem [#allocation7], 3
        %v658 = vld [vmem:[%s657] ss:$8 sm:$0xf]
        %v660 = vperm.slane %v658, 0
        %v661 = vperm.slane %v658, 1
        %v662 = vperm.slane %v658, 2
        %v663 = vperm.slane %v658, 3
        %v668 = vmul.f32 %v660, %v491
        %v669 = vmul.f32 %v661, %v531
        %v670 = vmul.f32 %v662, %v571
        %v671 = vmul.f32 %v663, %v611
        %s672 = scalar_lea.vmem [#allocation7], 4
        %v673 = vld [vmem:[%s672] ss:$8 sm:$0xf]
        %v675 = vperm.slane %v673, 0
        %v676 = vperm.slane %v673, 1
        %v677 = vperm.slane %v673, 2
        %v678 = vperm.slane %v673, 3
        %v683 = vmul.f32 %v675, %v491
        %v684 = vmul.f32 %v676, %v531
        %v685 = vmul.f32 %v677, %v571
        %v686 = vmul.f32 %v678, %v611
        %v691 = vrot.slane %v638, 4
        %v692 = vrot.slane %v639, 4
        %v693 = vrot.slane %v640, 4
        %v694 = vrot.slane %v641, 4
        %v703 = vrot.slane %v668, 4
        %v704 = vrot.slane %v669, 4
        %v705 = vrot.slane %v670, 4
        %v706 = vrot.slane %v671, 4
        %vm711 = vcmask 1043456
        %v712 = vsel %vm711, %v623, %v691
        %v713 = vsel %vm711, %v624, %v692
        %v714 = vsel %vm711, %v625, %v693
        %v715 = vsel %vm711, %v626, %v694
        %v716 = vsel %vm711, %v653, %v703
        %v717 = vsel %vm711, %v654, %v704
        %v718 = vsel %vm711, %v655, %v705
        %v719 = vsel %vm711, %v656, %v706
        %v720 = vld [vmem:[%s3] sm:$0xff]
        %vm721 = vcmask 162816
        %v723 = vsel %vm721, %v720, 0
        %v726 = vsel %vm711, %v683, 0
        %v729 = vsel %vm711, %v684, 0
        %v732 = vsel %vm711, %v685, 0
        %v735 = vsel %vm711, %v686, 0
        %737 = vmatpush.msra.mxu0 0.0
        %738 = vmatpush.msra.mxu0 0.0
        %739 = vmatpush.msra.mxu0 0.0
        %740 = vmatpush.msra.mxu0 0.0
        %741 = vmatpush.msra.mxu0 0.0
        %742 = vmatpush.msra.mxu0 0.0
        %743 = vmatpush.msra.mxu0 0.0
        %744 = vmatpush.msra.mxu0 0.0
        %745 = vmatpush.msra.mxu0 0.0
        %746 = vmatpush.msra.mxu0 0.0
        %747 = vmatpush.msra.mxu0 0.0
        %748 = vmatpush.msra.mxu0 0.0
        %749 = vmatpush.msra.mxu0 0.0
        %750 = vmatpush.msra.mxu0 %v726
        %751 = vmatpush.msra.mxu0 %v716
        %752 = vmatpush.msra.mxu0 %v712
        %753 = vmatmul.f32.gmra.mxu0 %v723
        %v754 = vpop.f32.mrf.mxu0
        %v755 = vadd.f32 0.0, %v754
        %756 = vdwg.mxu0
        %757 = vmatpush.msra.mxu0 0.0
        %758 = vmatpush.msra.mxu0 0.0
        %759 = vmatpush.msra.mxu0 0.0
        %760 = vmatpush.msra.mxu0 0.0
        %761 = vmatpush.msra.mxu0 0.0
        %762 = vmatpush.msra.mxu0 0.0
        %763 = vmatpush.msra.mxu0 0.0
        %764 = vmatpush.msra.mxu0 0.0
        %765 = vmatpush.msra.mxu0 0.0
        %766 = vmatpush.msra.mxu0 0.0
        %767 = vmatpush.msra.mxu0 0.0
        %768 = vmatpush.msra.mxu0 0.0
        %769 = vmatpush.msra.mxu0 0.0
        %770 = vmatpush.msra.mxu0 %v729
        %771 = vmatpush.msra.mxu0 %v717
        %772 = vmatpush.msra.mxu0 %v713
        %773 = vmatmul.f32.gmra.mxu0 %v723
        %v774 = vpop.f32.mrf.mxu0
        %v775 = vadd.f32 0.0, %v774
        %776 = vdwg.mxu0
        %777 = vmatpush.msra.mxu0 0.0
        %778 = vmatpush.msra.mxu0 0.0
        %779 = vmatpush.msra.mxu0 0.0
        %780 = vmatpush.msra.mxu0 0.0
        %781 = vmatpush.msra.mxu0 0.0
        %782 = vmatpush.msra.mxu0 0.0
        %783 = vmatpush.msra.mxu0 0.0
        %784 = vmatpush.msra.mxu0 0.0
        %785 = vmatpush.msra.mxu0 0.0
        %786 = vmatpush.msra.mxu0 0.0
        %787 = vmatpush.msra.mxu0 0.0
        %788 = vmatpush.msra.mxu0 0.0
        %789 = vmatpush.msra.mxu0 0.0
        %790 = vmatpush.msra.mxu0 %v732
        %791 = vmatpush.msra.mxu0 %v718
        %792 = vmatpush.msra.mxu0 %v714
        %793 = vmatmul.f32.gmra.mxu0 %v723
        %v794 = vpop.f32.mrf.mxu0
        %v795 = vadd.f32 0.0, %v794
        %796 = vdwg.mxu0
        %797 = vmatpush.msra.mxu0 0.0
        %798 = vmatpush.msra.mxu0 0.0
        %799 = vmatpush.msra.mxu0 0.0
        %800 = vmatpush.msra.mxu0 0.0
        %801 = vmatpush.msra.mxu0 0.0
        %802 = vmatpush.msra.mxu0 0.0
        %803 = vmatpush.msra.mxu0 0.0
        %804 = vmatpush.msra.mxu0 0.0
        %805 = vmatpush.msra.mxu0 0.0
        %806 = vmatpush.msra.mxu0 0.0
        %807 = vmatpush.msra.mxu0 0.0
        %808 = vmatpush.msra.mxu0 0.0
        %809 = vmatpush.msra.mxu0 0.0
        %810 = vmatpush.msra.mxu0 %v735
        %811 = vmatpush.msra.mxu0 %v719
        %812 = vmatpush.msra.mxu0 %v715
        %813 = vmatmul.f32.gmra.mxu0 %v723
        %v814 = vpop.f32.mrf.mxu0
        %v815 = vadd.f32 0.0, %v814
        %816 = vdwg.mxu0
        %v817 = vld [vmem:[#allocation8] sm:$0xff]
        %v818 = vld [vmem:[#allocation8 + $0x8] sm:$0xff]
        %v819 = vld [vmem:[#allocation8 + $0x10] sm:$0xff]
        %v820 = vld [vmem:[#allocation8 + $0x18] sm:$0xff]
        %v821 = vld [vmem:[#allocation8 + $0x20] sm:$0xff]
        %v822 = vld [vmem:[#allocation8 + $0x28] sm:$0xff]
        %v823 = vld [vmem:[#allocation8 + $0x30] sm:$0xff]
        %v824 = vld [vmem:[#allocation8 + $0x38] sm:$0xff]
        %v825 = vld [vmem:[#allocation8 + $0x40] sm:$0xff]
        %v826 = vld [vmem:[#allocation8 + $0x48] sm:$0xff]
        %v827 = vld [vmem:[#allocation8 + $0x50] sm:$0xff]
        %v828 = vld [vmem:[#allocation8 + $0x58] sm:$0xff]
        %v829 = vld [vmem:[#allocation8 + $0x60] sm:$0xff]
        %v830 = vld [vmem:[#allocation8 + $0x68] sm:$0xff]
        %v831 = vld [vmem:[#allocation8 + $0x70] sm:$0xff]
        %v832 = vld [vmem:[#allocation8 + $0x78] sm:$0xff]
        %v833 = vld [vmem:[#allocation8 + $0x80] sm:$0xff]
        %v834 = vld [vmem:[#allocation8 + $0x88] sm:$0xff]
        %v835 = vld [vmem:[#allocation8 + $0x90] sm:$0xff]
        %v836 = vld [vmem:[#allocation8 + $0x98] sm:$0xff]
        %v837 = vld [vmem:[#allocation8 + $0xa0] sm:$0xff]
        %v838 = vld [vmem:[#allocation8 + $0xa8] sm:$0xff]
        %v839 = vld [vmem:[#allocation8 + $0xb0] sm:$0xff]
        %v840 = vld [vmem:[#allocation8 + $0xb8] sm:$0xff]
        %v841 = vld [vmem:[#allocation8 + $0xc0] sm:$0xff]
        %v842 = vld [vmem:[#allocation8 + $0xc8] sm:$0xff]
        %v843 = vld [vmem:[#allocation8 + $0xd0] sm:$0xff]
        %v844 = vld [vmem:[#allocation8 + $0xd8] sm:$0xff]
        %v845 = vld [vmem:[#allocation8 + $0xe0] sm:$0xff]
        %v846 = vld [vmem:[#allocation8 + $0xe8] sm:$0xff]
        %v847 = vld [vmem:[#allocation8 + $0xf0] sm:$0xff]
        %v848 = vld [vmem:[#allocation8 + $0xf8] sm:$0xff]
        %v849 = vld [vmem:[#allocation8 + $0x100] sm:$0xff]
        %v850 = vld [vmem:[#allocation8 + $0x108] sm:$0xff]
        %v851 = vld [vmem:[#allocation8 + $0x110] sm:$0xff]
        %v852 = vld [vmem:[#allocation8 + $0x118] sm:$0xff]
        %v853 = vld [vmem:[#allocation8 + $0x120] sm:$0xff]
        %v854 = vld [vmem:[#allocation8 + $0x128] sm:$0xff]
        %v855 = vld [vmem:[#allocation8 + $0x130] sm:$0xff]
        %v856 = vld [vmem:[#allocation8 + $0x138] sm:$0xff]
        %v857 = vld [vmem:[#allocation8 + $0x140] sm:$0xff]
        %v858 = vld [vmem:[#allocation8 + $0x148] sm:$0xff]
        %v859 = vld [vmem:[#allocation8 + $0x150] sm:$0xff]
        %v860 = vld [vmem:[#allocation8 + $0x158] sm:$0xff]
        %v861 = vld [vmem:[#allocation8 + $0x160] sm:$0xff]
        %v862 = vld [vmem:[#allocation8 + $0x168] sm:$0xff]
        %v863 = vld [vmem:[#allocation8 + $0x170] sm:$0xff]
        %v864 = vld [vmem:[#allocation8 + $0x178] sm:$0xff]
        %v865 = vld [vmem:[#allocation8 + $0x180] sm:$0xff]
        %v866 = vld [vmem:[#allocation8 + $0x188] sm:$0xff]
        %v867 = vld [vmem:[#allocation8 + $0x190] sm:$0xff]
        %v868 = vld [vmem:[#allocation8 + $0x198] sm:$0xff]
        %v869 = vld [vmem:[#allocation8 + $0x1a0] sm:$0xff]
        %v870 = vld [vmem:[#allocation8 + $0x1a8] sm:$0xff]
        %v871 = vld [vmem:[#allocation8 + $0x1b0] sm:$0xff]
        %v872 = vld [vmem:[#allocation8 + $0x1b8] sm:$0xff]
        %v873 = vld [vmem:[#allocation8 + $0x1c0] sm:$0xff]
        %v874 = vld [vmem:[#allocation8 + $0x1c8] sm:$0xff]
        %v875 = vld [vmem:[#allocation8 + $0x1d0] sm:$0xff]
        %v876 = vld [vmem:[#allocation8 + $0x1d8] sm:$0xff]
        %v877 = vld [vmem:[#allocation8 + $0x1e0] sm:$0xff]
        %v878 = vld [vmem:[#allocation8 + $0x1e8] sm:$0xff]
        %v879 = vld [vmem:[#allocation8 + $0x1f0] sm:$0xff]
        %v880 = vld [vmem:[#allocation8 + $0x1f8] sm:$0xff]
        %v881 = vld [vmem:[#allocation8 + $0x200] sm:$0xff]
        %v882 = vld [vmem:[#allocation8 + $0x208] sm:$0xff]
        %v883 = vld [vmem:[#allocation8 + $0x210] sm:$0xff]
        %v884 = vld [vmem:[#allocation8 + $0x218] sm:$0xff]
        %v885 = vld [vmem:[#allocation8 + $0x220] sm:$0xff]
        %v886 = vld [vmem:[#allocation8 + $0x228] sm:$0xff]
        %v887 = vld [vmem:[#allocation8 + $0x230] sm:$0xff]
        %v888 = vld [vmem:[#allocation8 + $0x238] sm:$0xff]
        %v889 = vld [vmem:[#allocation8 + $0x240] sm:$0xff]
        %v890 = vld [vmem:[#allocation8 + $0x248] sm:$0xff]
        %v891 = vld [vmem:[#allocation8 + $0x250] sm:$0xff]
        %v892 = vld [vmem:[#allocation8 + $0x258] sm:$0xff]
        %v893 = vld [vmem:[#allocation8 + $0x260] sm:$0xff]
        %v894 = vld [vmem:[#allocation8 + $0x268] sm:$0xff]
        %v895 = vld [vmem:[#allocation8 + $0x270] sm:$0xff]
        %v896 = vld [vmem:[#allocation8 + $0x278] sm:$0xff]
        %v897 = vld [vmem:[#allocation8 + $0x280] sm:$0xff]
        %v898 = vld [vmem:[#allocation8 + $0x288] sm:$0xff]
        %v899 = vld [vmem:[#allocation8 + $0x290] sm:$0xff]
        %v900 = vld [vmem:[#allocation8 + $0x298] sm:$0xff]
        %v901 = vld [vmem:[#allocation8 + $0x2a0] sm:$0xff]
        %v902 = vld [vmem:[#allocation8 + $0x2a8] sm:$0xff]
        %v903 = vld [vmem:[#allocation8 + $0x2b0] sm:$0xff]
        %v904 = vld [vmem:[#allocation8 + $0x2b8] sm:$0xff]
        %v905 = vld [vmem:[#allocation8 + $0x2c0] sm:$0xff]
        %v906 = vld [vmem:[#allocation8 + $0x2c8] sm:$0xff]
        %v907 = vld [vmem:[#allocation8 + $0x2d0] sm:$0xff]
        %v908 = vld [vmem:[#allocation8 + $0x2d8] sm:$0xff]
        %v909 = vld [vmem:[#allocation8 + $0x2e0] sm:$0xff]
        %v910 = vld [vmem:[#allocation8 + $0x2e8] sm:$0xff]
        %v911 = vld [vmem:[#allocation8 + $0x2f0] sm:$0xff]
        %v912 = vld [vmem:[#allocation8 + $0x2f8] sm:$0xff]
        %v913 = vld [vmem:[#allocation8 + $0x300] sm:$0xff]
        %v914 = vld [vmem:[#allocation8 + $0x308] sm:$0xff]
        %v915 = vld [vmem:[#allocation8 + $0x310] sm:$0xff]
        %v916 = vld [vmem:[#allocation8 + $0x318] sm:$0xff]
        %v917 = vld [vmem:[#allocation8 + $0x320] sm:$0xff]
        %v918 = vld [vmem:[#allocation8 + $0x328] sm:$0xff]
        %v919 = vld [vmem:[#allocation8 + $0x330] sm:$0xff]
        %v920 = vld [vmem:[#allocation8 + $0x338] sm:$0xff]
        %v921 = vld [vmem:[#allocation8 + $0x340] sm:$0xff]
        %v922 = vld [vmem:[#allocation8 + $0x348] sm:$0xff]
        %v923 = vld [vmem:[#allocation8 + $0x350] sm:$0xff]
        %v924 = vld [vmem:[#allocation8 + $0x358] sm:$0xff]
        %v925 = vld [vmem:[#allocation8 + $0x360] sm:$0xff]
        %v926 = vld [vmem:[#allocation8 + $0x368] sm:$0xff]
        %v927 = vld [vmem:[#allocation8 + $0x370] sm:$0xff]
        %v928 = vld [vmem:[#allocation8 + $0x378] sm:$0xff]
        %v929 = vld [vmem:[#allocation8 + $0x380] sm:$0xff]
        %v930 = vld [vmem:[#allocation8 + $0x388] sm:$0xff]
        %v931 = vld [vmem:[#allocation8 + $0x390] sm:$0xff]
        %v932 = vld [vmem:[#allocation8 + $0x398] sm:$0xff]
        %v933 = vld [vmem:[#allocation8 + $0x3a0] sm:$0xff]
        %v934 = vld [vmem:[#allocation8 + $0x3a8] sm:$0xff]
        %v935 = vld [vmem:[#allocation8 + $0x3b0] sm:$0xff]
        %v936 = vld [vmem:[#allocation8 + $0x3b8] sm:$0xff]
        %v937 = vld [vmem:[#allocation8 + $0x3c0] sm:$0xff]
        %v938 = vld [vmem:[#allocation8 + $0x3c8] sm:$0xff]
        %v939 = vld [vmem:[#allocation8 + $0x3d0] sm:$0xff]
        %v940 = vld [vmem:[#allocation8 + $0x3d8] sm:$0xff]
        %v941 = vld [vmem:[#allocation8 + $0x3e0] sm:$0xff]
        %v942 = vld [vmem:[#allocation8 + $0x3e8] sm:$0xff]
        %v943 = vld [vmem:[#allocation8 + $0x3f0] sm:$0xff]
        %v944 = vld [vmem:[#allocation8 + $0x3f8] sm:$0xff]
        %v945 = vld [vmem:[%s5] sm:$0xff]
        %947 = vset.pattern.permute.xlu0 0
        %948 = vperm.xlu0 %947, %v945
        %v949 = vpop.permute.xlu0 %948
        %951 = vmatpush.msra.mxu0 %v847
        %952 = vmatpush.msra.mxu0 %v845
        %953 = vmatpush.msra.mxu0 %v843
        %954 = vmatpush.msra.mxu0 %v841
        %955 = vmatpush.msra.mxu0 %v839
        %956 = vmatpush.msra.mxu0 %v837
        %957 = vmatpush.msra.mxu0 %v835
        %958 = vmatpush.msra.mxu0 %v833
        %959 = vmatpush.msra.mxu0 %v831
        %960 = vmatpush.msra.mxu0 %v829
        %961 = vmatpush.msra.mxu0 %v827
        %962 = vmatpush.msra.mxu0 %v825
        %963 = vmatpush.msra.mxu0 %v823
        %964 = vmatpush.msra.mxu0 %v821
        %965 = vmatpush.msra.mxu0 %v819
        %966 = vmatpush.msra.mxu0 %v817
        %967 = vmatmul.f32.gmra.mxu0 %v755
        %v968 = vpop.f32.mrf.mxu0
        %v969 = vadd.f32 %v949, %v968
        %970 = vdwg.mxu0
        %971 = vmatpush.msra.mxu0 %v879
        %972 = vmatpush.msra.mxu0 %v877
        %973 = vmatpush.msra.mxu0 %v875
        %974 = vmatpush.msra.mxu0 %v873
        %975 = vmatpush.msra.mxu0 %v871
        %976 = vmatpush.msra.mxu0 %v869
        %977 = vmatpush.msra.mxu0 %v867
        %978 = vmatpush.msra.mxu0 %v865
        %979 = vmatpush.msra.mxu0 %v863
        %980 = vmatpush.msra.mxu0 %v861
        %981 = vmatpush.msra.mxu0 %v859
        %982 = vmatpush.msra.mxu0 %v857
        %983 = vmatpush.msra.mxu0 %v855
        %984 = vmatpush.msra.mxu0 %v853
        %985 = vmatpush.msra.mxu0 %v851
        %986 = vmatpush.msra.mxu0 %v849
        %987 = vmatmul.f32.gmra.mxu0 %v775
        %v988 = vpop.f32.mrf.mxu0
        %v989 = vadd.f32 %v969, %v988
        %990 = vdwg.mxu0
        %991 = vmatpush.msra.mxu0 %v911
        %992 = vmatpush.msra.mxu0 %v909
        %993 = vmatpush.msra.mxu0 %v907
        %994 = vmatpush.msra.mxu0 %v905
        %995 = vmatpush.msra.mxu0 %v903
        %996 = vmatpush.msra.mxu0 %v901
        %997 = vmatpush.msra.mxu0 %v899
        %998 = vmatpush.msra.mxu0 %v897
        %999 = vmatpush.msra.mxu0 %v895
        %1000 = vmatpush.msra.mxu0 %v893
        %1001 = vmatpush.msra.mxu0 %v891
        %1002 = vmatpush.msra.mxu0 %v889
        %1003 = vmatpush.msra.mxu0 %v887
        %1004 = vmatpush.msra.mxu0 %v885
        %1005 = vmatpush.msra.mxu0 %v883
        %1006 = vmatpush.msra.mxu0 %v881
        %1007 = vmatmul.f32.gmra.mxu0 %v795
        %v1008 = vpop.f32.mrf.mxu0
        %v1009 = vadd.f32 %v989, %v1008
        %1010 = vdwg.mxu0
        %1011 = vmatpush.msra.mxu0 %v943
        %1012 = vmatpush.msra.mxu0 %v941
        %1013 = vmatpush.msra.mxu0 %v939
        %1014 = vmatpush.msra.mxu0 %v937
        %1015 = vmatpush.msra.mxu0 %v935
        %1016 = vmatpush.msra.mxu0 %v933
        %1017 = vmatpush.msra.mxu0 %v931
        %1018 = vmatpush.msra.mxu0 %v929
        %1019 = vmatpush.msra.mxu0 %v927
        %1020 = vmatpush.msra.mxu0 %v925
        %1021 = vmatpush.msra.mxu0 %v923
        %1022 = vmatpush.msra.mxu0 %v921
        %1023 = vmatpush.msra.mxu0 %v919
        %1024 = vmatpush.msra.mxu0 %v917
        %1025 = vmatpush.msra.mxu0 %v915
        %1026 = vmatpush.msra.mxu0 %v913
        %1027 = vmatmul.f32.gmra.mxu0 %v815
        %v1028 = vpop.f32.mrf.mxu0
        %v1029 = vadd.f32 %v1009, %v1028
        %1030 = vdwg.mxu0
        %1031 = vmatpush.msra.mxu0 %v848
        %1032 = vmatpush.msra.mxu0 %v846
        %1033 = vmatpush.msra.mxu0 %v844
        %1034 = vmatpush.msra.mxu0 %v842
        %1035 = vmatpush.msra.mxu0 %v840
        %1036 = vmatpush.msra.mxu0 %v838
        %1037 = vmatpush.msra.mxu0 %v836
        %1038 = vmatpush.msra.mxu0 %v834
        %1039 = vmatpush.msra.mxu0 %v832
        %1040 = vmatpush.msra.mxu0 %v830
        %1041 = vmatpush.msra.mxu0 %v828
        %1042 = vmatpush.msra.mxu0 %v826
        %1043 = vmatpush.msra.mxu0 %v824
        %1044 = vmatpush.msra.mxu0 %v822
        %1045 = vmatpush.msra.mxu0 %v820
        %1046 = vmatpush.msra.mxu0 %v818
        %1047 = vmatmul.f32.gmra.mxu0 %v755
        %v1048 = vpop.f32.mrf.mxu0
        %v1049 = vadd.f32 %v949, %v1048
        %1050 = vdwg.mxu0
        %1051 = vmatpush.msra.mxu0 %v880
        %1052 = vmatpush.msra.mxu0 %v878
        %1053 = vmatpush.msra.mxu0 %v876
        %1054 = vmatpush.msra.mxu0 %v874
        %1055 = vmatpush.msra.mxu0 %v872
        %1056 = vmatpush.msra.mxu0 %v870
        %1057 = vmatpush.msra.mxu0 %v868
        %1058 = vmatpush.msra.mxu0 %v866
        %1059 = vmatpush.msra.mxu0 %v864
        %1060 = vmatpush.msra.mxu0 %v862
        %1061 = vmatpush.msra.mxu0 %v860
        %1062 = vmatpush.msra.mxu0 %v858
        %1063 = vmatpush.msra.mxu0 %v856
        %1064 = vmatpush.msra.mxu0 %v854
        %1065 = vmatpush.msra.mxu0 %v852
        %1066 = vmatpush.msra.mxu0 %v850
        %1067 = vmatmul.f32.gmra.mxu0 %v775
        %v1068 = vpop.f32.mrf.mxu0
        %v1069 = vadd.f32 %v1049, %v1068
        %1070 = vdwg.mxu0
        %1071 = vmatpush.msra.mxu0 %v912
        %1072 = vmatpush.msra.mxu0 %v910
        %1073 = vmatpush.msra.mxu0 %v908
        %1074 = vmatpush.msra.mxu0 %v906
        %1075 = vmatpush.msra.mxu0 %v904
        %1076 = vmatpush.msra.mxu0 %v902
        %1077 = vmatpush.msra.mxu0 %v900
        %1078 = vmatpush.msra.mxu0 %v898
        %1079 = vmatpush.msra.mxu0 %v896
        %1080 = vmatpush.msra.mxu0 %v894
        %1081 = vmatpush.msra.mxu0 %v892
        %1082 = vmatpush.msra.mxu0 %v890
        %1083 = vmatpush.msra.mxu0 %v888
        %1084 = vmatpush.msra.mxu0 %v886
        %1085 = vmatpush.msra.mxu0 %v884
        %1086 = vmatpush.msra.mxu0 %v882
        %1087 = vmatmul.f32.gmra.mxu0 %v795
        %v1088 = vpop.f32.mrf.mxu0
        %v1089 = vadd.f32 %v1069, %v1088
        %1090 = vdwg.mxu0
        %1091 = vmatpush.msra.mxu0 %v944
        %1092 = vmatpush.msra.mxu0 %v942
        %1093 = vmatpush.msra.mxu0 %v940
        %1094 = vmatpush.msra.mxu0 %v938
        %1095 = vmatpush.msra.mxu0 %v936
        %1096 = vmatpush.msra.mxu0 %v934
        %1097 = vmatpush.msra.mxu0 %v932
        %1098 = vmatpush.msra.mxu0 %v930
        %1099 = vmatpush.msra.mxu0 %v928
        %1100 = vmatpush.msra.mxu0 %v926
        %1101 = vmatpush.msra.mxu0 %v924
        %1102 = vmatpush.msra.mxu0 %v922
        %1103 = vmatpush.msra.mxu0 %v920
        %1104 = vmatpush.msra.mxu0 %v918
        %1105 = vmatpush.msra.mxu0 %v916
        %1106 = vmatpush.msra.mxu0 %v914
        %1107 = vmatmul.f32.gmra.mxu0 %v815
        %v1108 = vpop.f32.mrf.mxu0
        %v1109 = vadd.f32 %v1089, %v1108
        %1110 = vdwg.mxu0
        %1111 = vst [vmem:[%s317] sm:$0xff] %v1029
        %1112 = vst [vmem:[%s317 + $0x8] sm:$0xff] %v1109
        %s1113 = sand.u32 %s164, 1
        %s1114 = scalar_lea.sflag [#allocation4], %s1113
        %s1115 = sand.u32 %s164, 1
        %s1116 = smul.addr %s1115, 16
        %s1117 = scalar_lea.vmem [#allocation10], %s1116
        // Predicated region
        $region61: #{tpu_custom_call.1} parent=43 // pred_check
          %p1118 = pneg %p174
        $region62: #{tpu_custom_call.1} parent=43 // pred_check_branch
          %1120 = sbr.rel (%p1118) target = $region64
        $region63: #{tpu_custom_call.1} parent=43 // pred_region
          %1122 = vsyncadd %s1114, 0
          %s1123 = smul.addr %s25, 2
          %s1124 = smul.addr %s1123, 8
          %s1125 = scalar_lea.hbm %s6, %s1124
          %s1127 = sshll.u32 %s1117, 4
          %s1128 = int_to_ptr.vmem [resolvable:$true] %s1127
          %s1129 = sshll.u32 %s1125, 4
          %s1130 = int_to_ptr.hbm [resolvable:$true] %s1129
          %1132 = dma.vmem_to_hbm [thread:$0]  %s1128, 256, %s1130, %s1114
        $region64: #{tpu_custom_call.1} parent=43 // pred_fallthru
          _
      $region44: #{tpu_custom_call.1} parent=5 // pred_fallthru
        _
      %p1133 = scmp.le.s32.totalorder 2, %s20
      // Predicated region
      $region65: #{tpu_custom_call.1} parent=5 // pred_check
        %p1134 = pneg %p1133
      $region66: #{tpu_custom_call.1} parent=5 // pred_check_branch
        %1136 = sbr.rel (%p1134) target = $region68
      $region67: #{tpu_custom_call.1} parent=5 // pred_region
        %s1137 = ssub.s32 %s20, 2
        // Predicated region
        $region69: #{tpu_custom_call.1} parent=67 // pred_check
          %p1138 = pneg %p180
        $region70: #{tpu_custom_call.1} parent=67 // pred_check_branch
          %1140 = sbr.rel (%p1138) target = $region72
        $region71: #{tpu_custom_call.1} parent=67 // pred_region
          %s1141 = sand.u32 %s165, 1
          %s1142 = scalar_lea.sflag [#allocation4], %s1141
          %s1143 = sand.u32 %s165, 1
          %s1144 = smul.addr %s1143, 16
          %s1145 = scalar_lea.vmem [#allocation10], %s1144
          %1147 = dma.done %s1142, 256
        $region72: #{tpu_custom_call.1} parent=67 // pred_fallthru
          _
      $region68: #{tpu_custom_call.1} parent=5 // pred_fallthru
        _
    $region6: #{tpu_custom_call.1} parent=1 // loop_footer
      %s24 = sadd.s32 1, %s20
    $region7: #{tpu_custom_call.1} parent=1 // loop_footer_branch
      %19 = sbr.rel target = $region3
    $region8: #{tpu_custom_call.1} parent=1 // loop_exit
      _
    %1148 = vsyncpa [#allocation3], 1
    %s1149 = scalar_lea.sflag [#allocation3], 1
    %1150 = vsyncpa %s1149, 1
    %1151 = vsyncpa [#allocation6], 1
    %1152 = vsyncpa [#allocation9], 1
    %1153 = vsyncpa [#allocation4], 1
    %s1154 = scalar_lea.sflag [#allocation4], 1
    %1155 = vsyncpa %s1154, 1

// kernel: tpu_custom_call.1
$region0: #{tpu_custom_call.1}
  #allocation0 [shape = 'u32[]', space=smem, size = 0x4, offset = 0x4, fixed_abs, tag = 'smem constant byte address 0x4 - core index']
  #allocation1 [shape = 'u32[72,128]{1,0:T(1,128)}', space=vmem, size = 0x9000, scoped, tag = 'internal scratch']
  %s0 = inlined_call_operand.hbm [shape: f32[2,4,256], index: 0, kind: input, shape index: {}]
  %s1 = inlined_call_operand.hbm [shape: f32[256,512], index: 1, kind: input, shape index: {}]
  %s2 = inlined_call_operand.hbm [shape: f32[5,512], index: 2, kind: input, shape index: {}]
  %s3 = inlined_call_operand.vmem [shape: f32[8,20], index: 3, kind: input, shape index: {}]
  %s4 = inlined_call_operand.hbm [shape: f32[512,256], index: 4, kind: input, shape index: {}]
  %s5 = inlined_call_operand.vmem [shape: f32[8,1], index: 5, kind: input, shape index: {}]
  %s6 = inlined_call_operand.hbm [shape: f32[2,8,256], index: 6, kind: output, shape index: {}]
  %s7 = sld [smem:[#allocation0]]
  $region73: #{tpu_custom_call.1} parent=0
    _
  %s9 = ssub.s32 1, %s7
  %s10 = scalar_select 0, %s9, %s7
  $region1: #{tpu_custom_call.1} parent=0
    #allocation2 [shape = 'u8[8192]{0}', space=vmem, size = 0x2000, scoped, tag = 'input window, operand 0']
    #allocation3 [shape = 's32[2]{0}', space=sflag, size = 0x8, scoped, tag = 'scoped memory for tpu_custom_call.1']
    #allocation4 [shape = 's32[2]{0}', space=sflag, size = 0x8, scoped, tag = 'scoped memory for tpu_custom_call.1']
    #allocation5 [shape = 'u8[524288]{0}', space=vmem, size = 0x80000, scoped, tag = 'input window, operand 1, single buffered']
    #allocation6 [shape = 's32[1]{0}', space=sflag, size = 0x4, scoped, tag = 'scoped memory for tpu_custom_call.1']
    #allocation7 [shape = 'u8[16384]{0}', space=vmem, size = 0x4000, scoped, tag = 'input window, operand 2, single buffered']
    #allocation8 [shape = 'u8[524288]{0}', space=vmem, size = 0x80000, scoped, tag = 'input window, operand 4, single buffered']
    #allocation9 [shape = 's32[1]{0}', space=sflag, size = 0x4, scoped, tag = 'scoped memory for tpu_custom_call.1']
    #allocation10 [shape = 'u8[16384]{0}', space=vmem, size = 0x4000, scoped, tag = 'output window, operand 0']
    %11 = vsyncpa [#allocation3], 0
    %s12 = scalar_lea.sflag [#allocation3], 1
    %13 = vsyncpa %s12, 0
    %14 = vsyncpa [#allocation6], 0
    %15 = vsyncpa [#allocation9], 0
    %16 = vsyncpa [#allocation4], 0
    %s17 = scalar_lea.sflag [#allocation4], 1
    %18 = vsyncpa %s17, 0
    loop: start=0, step=1, limit=4
    $region2: #{tpu_custom_call.1} parent=1 // loop_pre_header
      _
    $region3: #{tpu_custom_call.1} parent=1 // loop_header
      %s20 = sphi 0, %s24
      %p21 = scmp.ge.s32.totalorder %s20, 4
      %s30 = sphi 0, %s32
      %s33 = sphi 0, %s30
      %s34 = sphi 0, %s33
      %s50 = sphi 0, %s34
      %s54 = sphi 0, %s54
      %s56 = sphi 0, %s54
      %s57 = sphi 0, %s56
      %s71 = sphi 0, %s57
      %s75 = sphi 0, %s75
      %s77 = sphi 0, %s75
      %s78 = sphi 0, %s77
      %s92 = sphi 0, %s78
      %s96 = sphi 0, %s96
      %s98 = sphi 0, %s96
      %s99 = sphi 0, %s98
      %s113 = sphi 0, %s99
      %s117 = sphi 0, %s117
      %s119 = sphi 0, %s117
      %s120 = sphi 0, %s119
      %s134 = sphi 0, %s120
      %s138 = sphi 0, %s138
      %s140 = sphi 0, %s138
      %s141 = sphi 0, %s140
      %s155 = sphi 0, %s141
      %s161 = sphi 0, %s163
      %s164 = sphi 0, %s161
      %s165 = sphi 0, %s164
      %s181 = sphi 0, %s165
    $region4: #{tpu_custom_call.1} parent=1 // loop_header_branch
      %23 = sbr.rel (%p21) target = $region8
    $region5: #{tpu_custom_call.1} parent=1 // loop_body
      %s25 = ssub.s32 %s20, 1
      %s26 = ssub.s32 %s20, 2
      %s27 = sadd.s32 %s20, 1
      %s28 = ssub.s32 %s20, %s27
      %p29 = scmp.eq.s32.totalorder %s28, 0
      %s31 = sadd.s32 %s30, 1
      %s32 = scalar_select %p29, %s30, %s31
      %p35 = pneg %p29
      %p36 = scmp.eq.s32.totalorder %s20, 1
      %p37 = por %p35, %p36
      %p38 = scmp.ne.s32.totalorder %s30, %s33
      %p39 = scmp.eq.s32.totalorder %s20, 0
      %p40 = por %p38, %p39
      %p41 = scmp.ne.s32.totalorder %s30, %s33
      %p42 = scmp.eq.s32.totalorder %s25, 1
      %p43 = por %p41, %p42
      %p44 = scmp.ne.s32.totalorder %s33, %s34
      %p45 = scmp.eq.s32.totalorder %s25, 0
      %p46 = por %p44, %p45
      %p47 = scmp.ne.s32.totalorder %s33, %s34
      %p48 = scmp.eq.s32.totalorder %s26, 1
      %p49 = por %p47, %p48
      %p51 = scmp.ne.s32.totalorder %s34, %s50
      %p52 = scmp.eq.s32.totalorder %s26, 0
      %p53 = por %p51, %p52
      %s55 = sadd.s32 %s54, 1
      %p58 = scmp.eq.s32.totalorder %s20, 1
      %p59 = scmp.ne.s32.totalorder %s54, %s56
      %p60 = scmp.eq.s32.totalorder %s20, 0
      %p61 = por %p59, %p60
      %p62 = scmp.ne.s32.totalorder %s54, %s56
      %p63 = scmp.eq.s32.totalorder %s25, 1
      %p64 = por %p62, %p63
      %p65 = scmp.ne.s32.totalorder %s56, %s57
      %p66 = scmp.eq.s32.totalorder %s25, 0
      %p67 = por %p65, %p66
      %p68 = scmp.ne.s32.totalorder %s56, %s57
      %p69 = scmp.eq.s32.totalorder %s26, 1
      %p70 = por %p68, %p69
      %p72 = scmp.ne.s32.totalorder %s57, %s71
      %p73 = scmp.eq.s32.totalorder %s26, 0
      %p74 = por %p72, %p73
      %s76 = sadd.s32 %s75, 1
      %p79 = scmp.eq.s32.totalorder %s20, 1
      %p80 = scmp.ne.s32.totalorder %s75, %s77
      %p81 = scmp.eq.s32.totalorder %s20, 0
      %p82 = por %p80, %p81
      %p83 = scmp.ne.s32.totalorder %s75, %s77
      %p84 = scmp.eq.s32.totalorder %s25, 1
      %p85 = por %p83, %p84
      %p86 = scmp.ne.s32.totalorder %s77, %s78
      %p87 = scmp.eq.s32.totalorder %s25, 0
      %p88 = por %p86, %p87
      %p89 = scmp.ne.s32.totalorder %s77, %s78
      %p90 = scmp.eq.s32.totalorder %s26, 1
      %p91 = por %p89, %p90
      %p93 = scmp.ne.s32.totalorder %s78, %s92
      %p94 = scmp.eq.s32.totalorder %s26, 0
      %p95 = por %p93, %p94
      %s97 = sadd.s32 %s96, 1
      %p100 = scmp.eq.s32.totalorder %s20, 1
      %p101 = scmp.ne.s32.totalorder %s96, %s98
      %p102 = scmp.eq.s32.totalorder %s20, 0
      %p103 = por %p101, %p102
      %p104 = scmp.ne.s32.totalorder %s96, %s98
      %p105 = scmp.eq.s32.totalorder %s25, 1
      %p106 = por %p104, %p105
      %p107 = scmp.ne.s32.totalorder %s98, %s99
      %p108 = scmp.eq.s32.totalorder %s25, 0
      %p109 = por %p107, %p108
      %p110 = scmp.ne.s32.totalorder %s98, %s99
      %p111 = scmp.eq.s32.totalorder %s26, 1
      %p112 = por %p110, %p111
      %p114 = scmp.ne.s32.totalorder %s99, %s113
      %p115 = scmp.eq.s32.totalorder %s26, 0
      %p116 = por %p114, %p115
      %s118 = sadd.s32 %s117, 1
      %p121 = scmp.eq.s32.totalorder %s20, 1
      %p122 = scmp.ne.s32.totalorder %s117, %s119
      %p123 = scmp.eq.s32.totalorder %s20, 0
      %p124 = por %p122, %p123
      %p125 = scmp.ne.s32.totalorder %s117, %s119
      %p126 = scmp.eq.s32.totalorder %s25, 1
      %p127 = por %p125, %p126
      %p128 = scmp.ne.s32.totalorder %s119, %s120
      %p129 = scmp.eq.s32.totalorder %s25, 0
      %p130 = por %p128, %p129
      %p131 = scmp.ne.s32.totalorder %s119, %s120
      %p132 = scmp.eq.s32.totalorder %s26, 1
      %p133 = por %p131, %p132
      %p135 = scmp.ne.s32.totalorder %s120, %s134
      %p136 = scmp.eq.s32.totalorder %s26, 0
      %p137 = por %p135, %p136
      %s139 = sadd.s32 %s138, 1
      %p142 = scmp.eq.s32.totalorder %s20, 1
      %p143 = scmp.ne.s32.totalorder %s138, %s140
      %p144 = scmp.eq.s32.totalorder %s20, 0
      %p145 = por %p143, %p144
      %p146 = scmp.ne.s32.totalorder %s138, %s140
      %p147 = scmp.eq.s32.totalorder %s25, 1
      %p148 = por %p146, %p147
      %p149 = scmp.ne.s32.totalorder %s140, %s141
      %p150 = scmp.eq.s32.totalorder %s25, 0
      %p151 = por %p149, %p150
      %p152 = scmp.ne.s32.totalorder %s140, %s141
      %p153 = scmp.eq.s32.totalorder %s26, 1
      %p154 = por %p152, %p153
      %p156 = scmp.ne.s32.totalorder %s141, %s155
      %p157 = scmp.eq.s32.totalorder %s26, 0
      %p158 = por %p156, %p157
      %s159 = ssub.s32 %s20, %s27
      %p160 = scmp.eq.s32.totalorder %s159, 0
      %s162 = sadd.s32 %s161, 1
      %s163 = scalar_select %p160, %s161, %s162
      %p166 = pneg %p160
      %p167 = scmp.eq.s32.totalorder %s20, 1
      %p168 = por %p166, %p167
      %p169 = scmp.ne.s32.totalorder %s161, %s164
      %p170 = scmp.eq.s32.totalorder %s20, 0
      %p171 = por %p169, %p170
      %p172 = scmp.ne.s32.totalorder %s161, %s164
      %p173 = scmp.eq.s32.totalorder %s25, 1
      %p174 = por %p172, %p173
      %p175 = scmp.ne.s32.totalorder %s164, %s165
      %p176 = scmp.eq.s32.totalorder %s25, 0
      %p177 = por %p175, %p176
      %p178 = scmp.ne.s32.totalorder %s164, %s165
      %p179 = scmp.eq.s32.totalorder %s26, 1
      %p180 = por %p178, %p179
      %p182 = scmp.ne.s32.totalorder %s165, %s181
      %p183 = scmp.eq.s32.totalorder %s26, 0
      %p184 = por %p182, %p183
      %p185 = scmp.le.s32.totalorder 1, %s20
      %p186 = scmp.lt.s32.totalorder %s20, 3
      %p187 = pnand %p185, %p186
      %p188 = pneg %p187
      // Predicated region
      $region9: #{tpu_custom_call.1} parent=5 // pred_check
        _
      $region10: #{tpu_custom_call.1} parent=5 // pred_check_branch
        %190 = sbr.rel (%p187) target = $region12
      $region11: #{tpu_custom_call.1} parent=5 // pred_region
        %s191 = ssub.s32 %s20, 1
        // Predicated region
        $region13: #{tpu_custom_call.1} parent=11 // pred_check
          %p192 = pneg %p67
        $region14: #{tpu_custom_call.1} parent=11 // pred_check_branch
          %194 = sbr.rel (%p192) target = $region16
        $region15: #{tpu_custom_call.1} parent=11 // pred_region
          %196 = vsyncadd [#allocation6], 0
          %s197 = sshll.u32 %s1, 4
          %s198 = int_to_ptr.hbm [resolvable:$true] %s197
          %s199 = sshll.u32 [#allocation5], 4
          %s200 = int_to_ptr.vmem [resolvable:$true] %s199
          %205 = dma.hbm_to_vmem [thread:$0]  %s198, 16384, %s200, [#allocation6], 512, 512, 32
        $region16: #{tpu_custom_call.1} parent=11 // pred_fallthru
          _
        // Predicated region
        $region17: #{tpu_custom_call.1} parent=11 // pred_check
          %p206 = pneg %p88
        $region18: #{tpu_custom_call.1} parent=11 // pred_check_branch
          %208 = sbr.rel (%p206) target = $region20
        $region19: #{tpu_custom_call.1} parent=11 // pred_region
          %210 = vsyncadd [#allocation6], 0
          %s212 = sshll.u32 %s2, 4
          %s213 = int_to_ptr.hbm [resolvable:$true] %s212
          %s214 = sshll.u32 [#allocation7], 4
          %s215 = int_to_ptr.vmem [resolvable:$true] %s214
          %217 = dma.hbm_to_vmem [thread:$0]  %s213, 512, %s215, [#allocation6]
        $region20: #{tpu_custom_call.1} parent=11 // pred_fallthru
          _
        // Predicated region
        $region21: #{tpu_custom_call.1} parent=11 // pred_check
          %p218 = pneg %p109
        $region22: #{tpu_custom_call.1} parent=11 // pred_check_branch
          %220 = sbr.rel (%p218) target = $region24
        $region23: #{tpu_custom_call.1} parent=11 // pred_region
          _
        $region24: #{tpu_custom_call.1} parent=11 // pred_fallthru
          _
        // Predicated region
        $region25: #{tpu_custom_call.1} parent=11 // pred_check
          %p221 = pneg %p130
        $region26: #{tpu_custom_call.1} parent=11 // pred_check_branch
          %223 = sbr.rel (%p221) target = $region28
        $region27: #{tpu_custom_call.1} parent=11 // pred_region
          %225 = vsyncadd [#allocation9], 0
          %s226 = sshll.u32 %s4, 4
          %s227 = int_to_ptr.hbm [resolvable:$true] %s226
          %s228 = sshll.u32 [#allocation8], 4
          %s229 = int_to_ptr.vmem [resolvable:$true] %s228
          %234 = dma.hbm_to_vmem [thread:$0]  %s227, 16384, %s229, [#allocation9], 256, 256, 16
        $region28: #{tpu_custom_call.1} parent=11 // pred_fallthru
          _
        // Predicated region
        $region29: #{tpu_custom_call.1} parent=11 // pred_check
          %p235 = pneg %p151
        $region30: #{tpu_custom_call.1} parent=11 // pred_check_branch
          %237 = sbr.rel (%p235) target = $region32
        $region31: #{tpu_custom_call.1} parent=11 // pred_region
          _
        $region32: #{tpu_custom_call.1} parent=11 // pred_fallthru
          _
      $region12: #{tpu_custom_call.1} parent=5 // pred_fallthru
        _
      %p238 = scmp.lt.s32.totalorder %s20, 2
      // Predicated region
      $region33: #{tpu_custom_call.1} parent=5 // pred_check
        %p239 = pneg %p238
      $region34: #{tpu_custom_call.1} parent=5 // pred_check_branch
        %241 = sbr.rel (%p239) target = $region36
      $region35: #{tpu_custom_call.1} parent=5 // pred_region
        // Predicated region
        $region37: #{tpu_custom_call.1} parent=35 // pred_check
          %p242 = pneg %p40
        $region38: #{tpu_custom_call.1} parent=35 // pred_check_branch
          %244 = sbr.rel (%p242) target = $region40
        $region39: #{tpu_custom_call.1} parent=35 // pred_region
          %s245 = sand.u32 %s30, 1
          %s246 = scalar_lea.sflag [#allocation3], %s245
          %s247 = sand.u32 %s30, 1
          %s248 = smul.addr %s247, 8
          %s249 = scalar_lea.vmem [#allocation2], %s248
          %251 = vsyncadd %s246, 0
          %s252 = smul.addr %s20, 2
          %s253 = smul.addr %s252, 4
          %s254 = scalar_lea.hbm %s0, %s253
          %s256 = sshll.u32 %s254, 4
          %s257 = int_to_ptr.hbm [resolvable:$true] %s256
          %s258 = sshll.u32 %s249, 4
          %s259 = int_to_ptr.vmem [resolvable:$true] %s258
          %261 = dma.hbm_to_vmem [thread:$0]  %s257, 128, %s259, %s246
        $region40: #{tpu_custom_call.1} parent=35 // pred_fallthru
          _
      $region36: #{tpu_custom_call.1} parent=5 // pred_fallthru
        _
      %p262 = scmp.le.s32.totalorder 1, %s20
      %p263 = scmp.lt.s32.totalorder %s20, 3
      %p264 = pnand %p262, %p263
      %p265 = pneg %p264
      // Predicated region
      $region41: #{tpu_custom_call.1} parent=5 // pred_check
        _
      $region42: #{tpu_custom_call.1} parent=5 // pred_check_branch
        %267 = sbr.rel (%p264) target = $region44
      $region43: #{tpu_custom_call.1} parent=5 // pred_region
        %s268 = ssub.s32 %s20, 1
        %s269 = sand.u32 %s33, 1
        %s270 = scalar_lea.sflag [#allocation3], %s269
        %s271 = sand.u32 %s33, 1
        %s272 = smul.addr %s271, 8
        %s273 = scalar_lea.vmem [#allocation2], %s272
        // Predicated region
        $region45: #{tpu_custom_call.1} parent=43 // pred_check
          %p274 = pneg %p46
        $region46: #{tpu_custom_call.1} parent=43 // pred_check_branch
          %276 = sbr.rel (%p274) target = $region48
        $region47: #{tpu_custom_call.1} parent=43 // pred_region
          %278 = dma.done %s270, 128
        $region48: #{tpu_custom_call.1} parent=43 // pred_fallthru
          _
        // Predicated region
        $region49: #{tpu_custom_call.1} parent=43 // pred_check
          %p279 = pneg %p67
        $region50: #{tpu_custom_call.1} parent=43 // pred_check_branch
          %281 = sbr.rel (%p279) target = $region52
        $region51: #{tpu_custom_call.1} parent=43 // pred_region
          %283 = dma.done [#allocation6], 16384
        $region52: #{tpu_custom_call.1} parent=43 // pred_fallthru
          _
        // Predicated region
        $region53: #{tpu_custom_call.1} parent=43 // pred_check
          %p284 = pneg %p88
        $region54: #{tpu_custom_call.1} parent=43 // pred_check_branch
          %286 = sbr.rel (%p284) target = $region56
        $region55: #{tpu_custom_call.1} parent=43 // pred_region
          %288 = dma.done [#allocation6], 512
        $region56: #{tpu_custom_call.1} parent=43 // pred_fallthru
          _
        // Predicated region
        $region57: #{tpu_custom_call.1} parent=43 // pred_check
          %p289 = pneg %p130
        $region58: #{tpu_custom_call.1} parent=43 // pred_check_branch
          %291 = sbr.rel (%p289) target = $region60
        $region59: #{tpu_custom_call.1} parent=43 // pred_region
          %293 = dma.done [#allocation9], 16384
        $region60: #{tpu_custom_call.1} parent=43 // pred_fallthru
          _
        %s294 = sand.u32 %s33, 1
        %s295 = scalar_lea.sflag [#allocation3], %s294
        %s296 = sand.u32 %s33, 1
        %s297 = smul.addr %s296, 8
        %s298 = scalar_lea.vmem [#allocation2], %s297
        %p299 = pneg %p46
        %p300 = pneg %p43
        %p301 = pneg %p67
        %p302 = pneg %p64
        %p303 = pneg %p88
        %p304 = pneg %p85
        %p305 = pneg %p109
        %p306 = pneg %p106
        %p307 = pneg %p130
        %p308 = pneg %p127
        %p309 = pneg %p151
        %p310 = pneg %p148
        %p311 = pneg %p177
        %p312 = pneg %p174
        %s313 = sand.u32 %s164, 1
        %s314 = scalar_lea.sflag [#allocation4], %s313
        %s315 = sand.u32 %s164, 1
        %s316 = smul.addr %s315, 16
        %s317 = scalar_lea.vmem [#allocation10], %s316
        %v318 = vld [vmem:[%s273] sm:$0xff]
        %v319 = vld [vmem:[#allocation5] sm:$0xff]
        %v320 = vld [vmem:[#allocation5 + $0x8] sm:$0xff]
        %v321 = vld [vmem:[#allocation5 + $0x10] sm:$0xff]
        %v322 = vld [vmem:[#allocation5 + $0x18] sm:$0xff]
        %v323 = vld [vmem:[#allocation5 + $0x20] sm:$0xff]
        %v324 = vld [vmem:[#allocation5 + $0x28] sm:$0xff]
        %v325 = vld [vmem:[#allocation5 + $0x30] sm:$0xff]
        %v326 = vld [vmem:[#allocation5 + $0x38] sm:$0xff]
        %v327 = vld [vmem:[#allocation5 + $0x40] sm:$0xff]
        %v328 = vld [vmem:[#allocation5 + $0x48] sm:$0xff]
        %v329 = vld [vmem:[#allocation5 + $0x50] sm:$0xff]
        %v330 = vld [vmem:[#allocation5 + $0x58] sm:$0xff]
        %v331 = vld [vmem:[#allocation5 + $0x60] sm:$0xff]
        %v332 = vld [vmem:[#allocation5 + $0x68] sm:$0xff]
        %v333 = vld [vmem:[#allocation5 + $0x70] sm:$0xff]
        %v334 = vld [vmem:[#allocation5 + $0x78] sm:$0xff]
        %v335 = vld [vmem:[#allocation5 + $0x80] sm:$0xff]
        %v336 = vld [vmem:[#allocation5 + $0x88] sm:$0xff]
        %v337 = vld [vmem:[#allocation5 + $0x90] sm:$0xff]
        %v338 = vld [vmem:[#allocation5 + $0x98] sm:$0xff]
        %v339 = vld [vmem:[#allocation5 + $0xa0] sm:$0xff]
        %v340 = vld [vmem:[#allocation5 + $0xa8] sm:$0xff]
        %v341 = vld [vmem:[#allocation5 + $0xb0] sm:$0xff]
        %v342 = vld [vmem:[#allocation5 + $0xb8] sm:$0xff]
        %v343 = vld [vmem:[#allocation5 + $0xc0] sm:$0xff]
        %v344 = vld [vmem:[#allocation5 + $0xc8] sm:$0xff]
        %v345 = vld [vmem:[#allocation5 + $0xd0] sm:$0xff]
        %v346 = vld [vmem:[#allocation5 + $0xd8] sm:$0xff]
        %v347 = vld [vmem:[#allocation5 + $0xe0] sm:$0xff]
        %v348 = vld [vmem:[#allocation5 + $0xe8] sm:$0xff]
        %v349 = vld [vmem:[#allocation5 + $0xf0] sm:$0xff]
        %v350 = vld [vmem:[#allocation5 + $0xf8] sm:$0xff]
        %v351 = vld [vmem:[#allocation5 + $0x100] sm:$0xff]
        %v352 = vld [vmem:[#allocation5 + $0x108] sm:$0xff]
        %v353 = vld [vmem:[#allocation5 + $0x110] sm:$0xff]
        %v354 = vld [vmem:[#allocation5 + $0x118] sm:$0xff]
        %v355 = vld [vmem:[#allocation5 + $0x120] sm:$0xff]
        %v356 = vld [vmem:[#allocation5 + $0x128] sm:$0xff]
        %v357 = vld [vmem:[#allocation5 + $0x130] sm:$0xff]
        %v358 = vld [vmem:[#allocation5 + $0x138] sm:$0xff]
        %v359 = vld [vmem:[#allocation5 + $0x140] sm:$0xff]
        %v360 = vld [vmem:[#allocation5 + $0x148] sm:$0xff]
        %v361 = vld [vmem:[#allocation5 + $0x150] sm:$0xff]
        %v362 = vld [vmem:[#allocation5 + $0x158] sm:$0xff]
        %v363 = vld [vmem:[#allocation5 + $0x160] sm:$0xff]
        %v364 = vld [vmem:[#allocation5 + $0x168] sm:$0xff]
        %v365 = vld [vmem:[#allocation5 + $0x170] sm:$0xff]
        %v366 = vld [vmem:[#allocation5 + $0x178] sm:$0xff]
        %v367 = vld [vmem:[#allocation5 + $0x180] sm:$0xff]
        %v368 = vld [vmem:[#allocation5 + $0x188] sm:$0xff]
        %v369 = vld [vmem:[#allocation5 + $0x190] sm:$0xff]
        %v370 = vld [vmem:[#allocation5 + $0x198] sm:$0xff]
        %v371 = vld [vmem:[#allocation5 + $0x1a0] sm:$0xff]
        %v372 = vld [vmem:[#allocation5 + $0x1a8] sm:$0xff]
        %v373 = vld [vmem:[#allocation5 + $0x1b0] sm:$0xff]
        %v374 = vld [vmem:[#allocation5 + $0x1b8] sm:$0xff]
        %v375 = vld [vmem:[#allocation5 + $0x1c0] sm:$0xff]
        %v376 = vld [vmem:[#allocation5 + $0x1c8] sm:$0xff]
        %v377 = vld [vmem:[#allocation5 + $0x1d0] sm:$0xff]
        %v378 = vld [vmem:[#allocation5 + $0x1d8] sm:$0xff]
        %v379 = vld [vmem:[#allocation5 + $0x1e0] sm:$0xff]
        %v380 = vld [vmem:[#allocation5 + $0x1e8] sm:$0xff]
        %v381 = vld [vmem:[#allocation5 + $0x1f0] sm:$0xff]
        %v382 = vld [vmem:[#allocation5 + $0x1f8] sm:$0xff]
        %v383 = vld [vmem:[#allocation5 + $0x200] sm:$0xff]
        %v384 = vld [vmem:[#allocation5 + $0x208] sm:$0xff]
        %v385 = vld [vmem:[#allocation5 + $0x210] sm:$0xff]
        %v386 = vld [vmem:[#allocation5 + $0x218] sm:$0xff]
        %v387 = vld [vmem:[#allocation5 + $0x220] sm:$0xff]
        %v388 = vld [vmem:[#allocation5 + $0x228] sm:$0xff]
        %v389 = vld [vmem:[#allocation5 + $0x230] sm:$0xff]
        %v390 = vld [vmem:[#allocation5 + $0x238] sm:$0xff]
        %v391 = vld [vmem:[#allocation5 + $0x240] sm:$0xff]
        %v392 = vld [vmem:[#allocation5 + $0x248] sm:$0xff]
        %v393 = vld [vmem:[#allocation5 + $0x250] sm:$0xff]
        %v394 = vld [vmem:[#allocation5 + $0x258] sm:$0xff]
        %v395 = vld [vmem:[#allocation5 + $0x260] sm:$0xff]
        %v396 = vld [vmem:[#allocation5 + $0x268] sm:$0xff]
        %v397 = vld [vmem:[#allocation5 + $0x270] sm:$0xff]
        %v398 = vld [vmem:[#allocation5 + $0x278] sm:$0xff]
        %v399 = vld [vmem:[#allocation5 + $0x280] sm:$0xff]
        %v400 = vld [vmem:[#allocation5 + $0x288] sm:$0xff]
        %v401 = vld [vmem:[#allocation5 + $0x290] sm:$0xff]
        %v402 = vld [vmem:[#allocation5 + $0x298] sm:$0xff]
        %v403 = vld [vmem:[#allocation5 + $0x2a0] sm:$0xff]
        %v404 = vld [vmem:[#allocation5 + $0x2a8] sm:$0xff]
        %v405 = vld [vmem:[#allocation5 + $0x2b0] sm:$0xff]
        %v406 = vld [vmem:[#allocation5 + $0x2b8] sm:$0xff]
        %v407 = vld [vmem:[#allocation5 + $0x2c0] sm:$0xff]
        %v408 = vld [vmem:[#allocation5 + $0x2c8] sm:$0xff]
        %v409 = vld [vmem:[#allocation5 + $0x2d0] sm:$0xff]
        %v410 = vld [vmem:[#allocation5 + $0x2d8] sm:$0xff]
        %v411 = vld [vmem:[#allocation5 + $0x2e0] sm:$0xff]
        %v412 = vld [vmem:[#allocation5 + $0x2e8] sm:$0xff]
        %v413 = vld [vmem:[#allocation5 + $0x2f0] sm:$0xff]
        %v414 = vld [vmem:[#allocation5 + $0x2f8] sm:$0xff]
        %v415 = vld [vmem:[#allocation5 + $0x300] sm:$0xff]
        %v416 = vld [vmem:[#allocation5 + $0x308] sm:$0xff]
        %v417 = vld [vmem:[#allocation5 + $0x310] sm:$0xff]
        %v418 = vld [vmem:[#allocation5 + $0x318] sm:$0xff]
        %v419 = vld [vmem:[#allocation5 + $0x320] sm:$0xff]
        %v420 = vld [vmem:[#allocation5 + $0x328] sm:$0xff]
        %v421 = vld [vmem:[#allocation5 + $0x330] sm:$0xff]
        %v422 = vld [vmem:[#allocation5 + $0x338] sm:$0xff]
        %v423 = vld [vmem:[#allocation5 + $0x340] sm:$0xff]
        %v424 = vld [vmem:[#allocation5 + $0x348] sm:$0xff]
        %v425 = vld [vmem:[#allocation5 + $0x350] sm:$0xff]
        %v426 = vld [vmem:[#allocation5 + $0x358] sm:$0xff]
        %v427 = vld [vmem:[#allocation5 + $0x360] sm:$0xff]
        %v428 = vld [vmem:[#allocation5 + $0x368] sm:$0xff]
        %v429 = vld [vmem:[#allocation5 + $0x370] sm:$0xff]
        %v430 = vld [vmem:[#allocation5 + $0x378] sm:$0xff]
        %v431 = vld [vmem:[#allocation5 + $0x380] sm:$0xff]
        %v432 = vld [vmem:[#allocation5 + $0x388] sm:$0xff]
        %v433 = vld [vmem:[#allocation5 + $0x390] sm:$0xff]
        %v434 = vld [vmem:[#allocation5 + $0x398] sm:$0xff]
        %v435 = vld [vmem:[#allocation5 + $0x3a0] sm:$0xff]
        %v436 = vld [vmem:[#allocation5 + $0x3a8] sm:$0xff]
        %v437 = vld [vmem:[#allocation5 + $0x3b0] sm:$0xff]
        %v438 = vld [vmem:[#allocation5 + $0x3b8] sm:$0xff]
        %v439 = vld [vmem:[#allocation5 + $0x3c0] sm:$0xff]
        %v440 = vld [vmem:[#allocation5 + $0x3c8] sm:$0xff]
        %v441 = vld [vmem:[#allocation5 + $0x3d0] sm:$0xff]
        %v442 = vld [vmem:[#allocation5 + $0x3d8] sm:$0xff]
        %v443 = vld [vmem:[#allocation5 + $0x3e0] sm:$0xff]
        %v444 = vld [vmem:[#allocation5 + $0x3e8] sm:$0xff]
        %v445 = vld [vmem:[#allocation5 + $0x3f0] sm:$0xff]
        %v446 = vld [vmem:[#allocation5 + $0x3f8] sm:$0xff]
        %448 = vst [vmem:[#allocation1] ss:$2 sm:$0xff] %v318
        %v449 = vld.sshfl [vmem:[#allocation1] sm:$0xff pattern:$0x75316420]
        %v450 = vld.sshfl [vmem:[#allocation1 + $0x8] sm:$0xff pattern:$0x75316420]
        %453 = vmatpush.msra.mxu0 %v379
        %454 = vmatpush.msra.mxu0 %v375
        %455 = vmatpush.msra.mxu0 %v371
        %456 = vmatpush.msra.mxu0 %v367
        %457 = vmatpush.msra.mxu0 %v363
        %458 = vmatpush.msra.mxu0 %v359
        %459 = vmatpush.msra.mxu0 %v355
        %460 = vmatpush.msra.mxu0 %v351
        %461 = vmatpush.msra.mxu0 %v347
        %462 = vmatpush.msra.mxu0 %v343
        %463 = vmatpush.msra.mxu0 %v339
        %464 = vmatpush.msra.mxu0 %v335
        %465 = vmatpush.msra.mxu0 %v331
        %466 = vmatpush.msra.mxu0 %v327
        %467 = vmatpush.msra.mxu0 %v323
        %468 = vmatpush.msra.mxu0 %v319
        %469 = vmatmul.f32.gmra.mxu0 %v449
        %v470 = vpop.f32.mrf.mxu0
        %v471 = vadd.f32 0.0, %v470
        %472 = vdwg.mxu0
        %473 = vmatpush.msra.mxu0 %v443
        %474 = vmatpush.msra.mxu0 %v439
        %475 = vmatpush.msra.mxu0 %v435
        %476 = vmatpush.msra.mxu0 %v431
        %477 = vmatpush.msra.mxu0 %v427
        %478 = vmatpush.msra.mxu0 %v423
        %479 = vmatpush.msra.mxu0 %v419
        %480 = vmatpush.msra.mxu0 %v415
        %481 = vmatpush.msra.mxu0 %v411
        %482 = vmatpush.msra.mxu0 %v407
        %483 = vmatpush.msra.mxu0 %v403
        %484 = vmatpush.msra.mxu0 %v399
        %485 = vmatpush.msra.mxu0 %v395
        %486 = vmatpush.msra.mxu0 %v391
        %487 = vmatpush.msra.mxu0 %v387
        %488 = vmatpush.msra.mxu0 %v383
        %489 = vmatmul.f32.gmra.mxu0 %v450
        %v490 = vpop.f32.mrf.mxu0
        %v491 = vadd.f32 %v471, %v490
        %492 = vdwg.mxu0
        %493 = vmatpush.msra.mxu0 %v380
        %494 = vmatpush.msra.mxu0 %v376
        %495 = vmatpush.msra.mxu0 %v372
        %496 = vmatpush.msra.mxu0 %v368
        %497 = vmatpush.msra.mxu0 %v364
        %498 = vmatpush.msra.mxu0 %v360
        %499 = vmatpush.msra.mxu0 %v356
        %500 = vmatpush.msra.mxu0 %v352
        %501 = vmatpush.msra.mxu0 %v348
        %502 = vmatpush.msra.mxu0 %v344
        %503 = vmatpush.msra.mxu0 %v340
        %504 = vmatpush.msra.mxu0 %v336
        %505 = vmatpush.msra.mxu0 %v332
        %506 = vmatpush.msra.mxu0 %v328
        %507 = vmatpush.msra.mxu0 %v324
        %508 = vmatpush.msra.mxu0 %v320
        %509 = vmatmul.f32.gmra.mxu0 %v449
        %v510 = vpop.f32.mrf.mxu0
        %v511 = vadd.f32 0.0, %v510
        %512 = vdwg.mxu0
        %513 = vmatpush.msra.mxu0 %v444
        %514 = vmatpush.msra.mxu0 %v440
        %515 = vmatpush.msra.mxu0 %v436
        %516 = vmatpush.msra.mxu0 %v432
        %517 = vmatpush.msra.mxu0 %v428
        %518 = vmatpush.msra.mxu0 %v424
        %519 = vmatpush.msra.mxu0 %v420
        %520 = vmatpush.msra.mxu0 %v416
        %521 = vmatpush.msra.mxu0 %v412
        %522 = vmatpush.msra.mxu0 %v408
        %523 = vmatpush.msra.mxu0 %v404
        %524 = vmatpush.msra.mxu0 %v400
        %525 = vmatpush.msra.mxu0 %v396
        %526 = vmatpush.msra.mxu0 %v392
        %527 = vmatpush.msra.mxu0 %v388
        %528 = vmatpush.msra.mxu0 %v384
        %529 = vmatmul.f32.gmra.mxu0 %v450
        %v530 = vpop.f32.mrf.mxu0
        %v531 = vadd.f32 %v511, %v530
        %532 = vdwg.mxu0
        %533 = vmatpush.msra.mxu0 %v381
        %534 = vmatpush.msra.mxu0 %v377
        %535 = vmatpush.msra.mxu0 %v373
        %536 = vmatpush.msra.mxu0 %v369
        %537 = vmatpush.msra.mxu0 %v365
        %538 = vmatpush.msra.mxu0 %v361
        %539 = vmatpush.msra.mxu0 %v357
        %540 = vmatpush.msra.mxu0 %v353
        %541 = vmatpush.msra.mxu0 %v349
        %542 = vmatpush.msra.mxu0 %v345
        %543 = vmatpush.msra.mxu0 %v341
        %544 = vmatpush.msra.mxu0 %v337
        %545 = vmatpush.msra.mxu0 %v333
        %546 = vmatpush.msra.mxu0 %v329
        %547 = vmatpush.msra.mxu0 %v325
        %548 = vmatpush.msra.mxu0 %v321
        %549 = vmatmul.f32.gmra.mxu0 %v449
        %v550 = vpop.f32.mrf.mxu0
        %v551 = vadd.f32 0.0, %v550
        %552 = vdwg.mxu0
        %553 = vmatpush.msra.mxu0 %v445
        %554 = vmatpush.msra.mxu0 %v441
        %555 = vmatpush.msra.mxu0 %v437
        %556 = vmatpush.msra.mxu0 %v433
        %557 = vmatpush.msra.mxu0 %v429
        %558 = vmatpush.msra.mxu0 %v425
        %559 = vmatpush.msra.mxu0 %v421
        %560 = vmatpush.msra.mxu0 %v417
        %561 = vmatpush.msra.mxu0 %v413
        %562 = vmatpush.msra.mxu0 %v409
        %563 = vmatpush.msra.mxu0 %v405
        %564 = vmatpush.msra.mxu0 %v401
        %565 = vmatpush.msra.mxu0 %v397
        %566 = vmatpush.msra.mxu0 %v393
        %567 = vmatpush.msra.mxu0 %v389
        %568 = vmatpush.msra.mxu0 %v385
        %569 = vmatmul.f32.gmra.mxu0 %v450
        %v570 = vpop.f32.mrf.mxu0
        %v571 = vadd.f32 %v551, %v570
        %572 = vdwg.mxu0
        %573 = vmatpush.msra.mxu0 %v382
        %574 = vmatpush.msra.mxu0 %v378
        %575 = vmatpush.msra.mxu0 %v374
        %576 = vmatpush.msra.mxu0 %v370
        %577 = vmatpush.msra.mxu0 %v366
        %578 = vmatpush.msra.mxu0 %v362
        %579 = vmatpush.msra.mxu0 %v358
        %580 = vmatpush.msra.mxu0 %v354
        %581 = vmatpush.msra.mxu0 %v350
        %582 = vmatpush.msra.mxu0 %v346
        %583 = vmatpush.msra.mxu0 %v342
        %584 = vmatpush.msra.mxu0 %v338
        %585 = vmatpush.msra.mxu0 %v334
        %586 = vmatpush.msra.mxu0 %v330
        %587 = vmatpush.msra.mxu0 %v326
        %588 = vmatpush.msra.mxu0 %v322
        %589 = vmatmul.f32.gmra.mxu0 %v449
        %v590 = vpop.f32.mrf.mxu0
        %v591 = vadd.f32 0.0, %v590
        %592 = vdwg.mxu0
        %593 = vmatpush.msra.mxu0 %v446
        %594 = vmatpush.msra.mxu0 %v442
        %595 = vmatpush.msra.mxu0 %v438
        %596 = vmatpush.msra.mxu0 %v434
        %597 = vmatpush.msra.mxu0 %v430
        %598 = vmatpush.msra.mxu0 %v426
        %599 = vmatpush.msra.mxu0 %v422
        %600 = vmatpush.msra.mxu0 %v418
        %601 = vmatpush.msra.mxu0 %v414
        %602 = vmatpush.msra.mxu0 %v410
        %603 = vmatpush.msra.mxu0 %v406
        %604 = vmatpush.msra.mxu0 %v402
        %605 = vmatpush.msra.mxu0 %v398
        %606 = vmatpush.msra.mxu0 %v394
        %607 = vmatpush.msra.mxu0 %v390
        %608 = vmatpush.msra.mxu0 %v386
        %609 = vmatmul.f32.gmra.mxu0 %v450
        %v610 = vpop.f32.mrf.mxu0
        %v611 = vadd.f32 %v591, %v610
        %612 = vdwg.mxu0
        %v613 = vld [vmem:[#allocation7] ss:$8 sm:$0xf]
        %v615 = vperm.slane %v613, 0
        %v616 = vperm.slane %v613, 1
        %v617 = vperm.slane %v613, 2
        %v618 = vperm.slane %v613, 3
        %v623 = vmul.f32 %v615, %v571
        %v624 = vmul.f32 %v616, %v611
        %v625 = vmul.f32 %v617, %v491
        %v626 = vmul.f32 %v618, %v531
        %s627 = scalar_lea.vmem [#allocation7], 1
        %v628 = vld [vmem:[%s627] ss:$8 sm:$0xf]
        %v630 = vperm.slane %v628, 0
        %v631 = vperm.slane %v628, 1
        %v632 = vperm.slane %v628, 2
        %v633 = vperm.slane %v628, 3
        %v638 = vmul.f32 %v630, %v571
        %v639 = vmul.f32 %v631, %v611
        %v640 = vmul.f32 %v632, %v491
        %v641 = vmul.f32 %v633, %v531
        %s642 = scalar_lea.vmem [#allocation7], 2
        %v643 = vld [vmem:[%s642] ss:$8 sm:$0xf]
        %v645 = vperm.slane %v643, 0
        %v646 = vperm.slane %v643, 1
        %v647 = vperm.slane %v643, 2
        %v648 = vperm.slane %v643, 3
        %v653 = vmul.f32 %v645, %v491
        %v654 = vmul.f32 %v646, %v531
        %v655 = vmul.f32 %v647, %v571
        %v656 = vmul.f32 %v648, %v611
        %s657 = scalar_lea.vmem [#allocation7], 3
        %v658 = vld [vmem:[%s657] ss:$8 sm:$0xf]
        %v660 = vperm.slane %v658, 0
        %v661 = vperm.slane %v658, 1
        %v662 = vperm.slane %v658, 2
        %v663 = vperm.slane %v658, 3
        %v668 = vmul.f32 %v660, %v491
        %v669 = vmul.f32 %v661, %v531
        %v670 = vmul.f32 %v662, %v571
        %v671 = vmul.f32 %v663, %v611
        %s672 = scalar_lea.vmem [#allocation7], 4
        %v673 = vld [vmem:[%s672] ss:$8 sm:$0xf]
        %v675 = vperm.slane %v673, 0
        %v676 = vperm.slane %v673, 1
        %v677 = vperm.slane %v673, 2
        %v678 = vperm.slane %v673, 3
        %v683 = vmul.f32 %v675, %v491
        %v684 = vmul.f32 %v676, %v531
        %v685 = vmul.f32 %v677, %v571
        %v686 = vmul.f32 %v678, %v611
        %v691 = vrot.slane %v638, 4
        %v692 = vrot.slane %v639, 4
        %v693 = vrot.slane %v640, 4
        %v694 = vrot.slane %v641, 4
        %v703 = vrot.slane %v668, 4
        %v704 = vrot.slane %v669, 4
        %v705 = vrot.slane %v670, 4
        %v706 = vrot.slane %v671, 4
        %vm711 = vcmask 1043456
        %v712 = vsel %vm711, %v623, %v691
        %v713 = vsel %vm711, %v624, %v692
        %v714 = vsel %vm711, %v625, %v693
        %v715 = vsel %vm711, %v626, %v694
        %v716 = vsel %vm711, %v653, %v703
        %v717 = vsel %vm711, %v654, %v704
        %v718 = vsel %vm711, %v655, %v705
        %v719 = vsel %vm711, %v656, %v706
        %v720 = vld [vmem:[%s3] sm:$0xff]
        %vm721 = vcmask 162816
        %v723 = vsel %vm721, %v720, 0
        %v726 = vsel %vm711, %v683, 0
        %v729 = vsel %vm711, %v684, 0
        %v732 = vsel %vm711, %v685, 0
        %v735 = vsel %vm711, %v686, 0
        %737 = vmatpush.msra.mxu0 0.0
        %738 = vmatpush.msra.mxu0 0.0
        %739 = vmatpush.msra.mxu0 0.0
        %740 = vmatpush.msra.mxu0 0.0
        %741 = vmatpush.msra.mxu0 0.0
        %742 = vmatpush.msra.mxu0 0.0
        %743 = vmatpush.msra.mxu0 0.0
        %744 = vmatpush.msra.mxu0 0.0
        %745 = vmatpush.msra.mxu0 0.0
        %746 = vmatpush.msra.mxu0 0.0
        %747 = vmatpush.msra.mxu0 0.0
        %748 = vmatpush.msra.mxu0 0.0
        %749 = vmatpush.msra.mxu0 0.0
        %750 = vmatpush.msra.mxu0 %v726
        %751 = vmatpush.msra.mxu0 %v716
        %752 = vmatpush.msra.mxu0 %v712
        %753 = vmatmul.f32.gmra.mxu0 %v723
        %v754 = vpop.f32.mrf.mxu0
        %v755 = vadd.f32 0.0, %v754
        %756 = vdwg.mxu0
        %757 = vmatpush.msra.mxu0 0.0
        %758 = vmatpush.msra.mxu0 0.0
        %759 = vmatpush.msra.mxu0 0.0
        %760 = vmatpush.msra.mxu0 0.0
        %761 = vmatpush.msra.mxu0 0.0
        %762 = vmatpush.msra.mxu0 0.0
        %763 = vmatpush.msra.mxu0 0.0
        %764 = vmatpush.msra.mxu0 0.0
        %765 = vmatpush.msra.mxu0 0.0
        %766 = vmatpush.msra.mxu0 0.0
        %767 = vmatpush.msra.mxu0 0.0
        %768 = vmatpush.msra.mxu0 0.0
        %769 = vmatpush.msra.mxu0 0.0
        %770 = vmatpush.msra.mxu0 %v729
        %771 = vmatpush.msra.mxu0 %v717
        %772 = vmatpush.msra.mxu0 %v713
        %773 = vmatmul.f32.gmra.mxu0 %v723
        %v774 = vpop.f32.mrf.mxu0
        %v775 = vadd.f32 0.0, %v774
        %776 = vdwg.mxu0
        %777 = vmatpush.msra.mxu0 0.0
        %778 = vmatpush.msra.mxu0 0.0
        %779 = vmatpush.msra.mxu0 0.0
        %780 = vmatpush.msra.mxu0 0.0
        %781 = vmatpush.msra.mxu0 0.0
        %782 = vmatpush.msra.mxu0 0.0
        %783 = vmatpush.msra.mxu0 0.0
        %784 = vmatpush.msra.mxu0 0.0
        %785 = vmatpush.msra.mxu0 0.0
        %786 = vmatpush.msra.mxu0 0.0
        %787 = vmatpush.msra.mxu0 0.0
        %788 = vmatpush.msra.mxu0 0.0
        %789 = vmatpush.msra.mxu0 0.0
        %790 = vmatpush.msra.mxu0 %v732
        %791 = vmatpush.msra.mxu0 %v718
        %792 = vmatpush.msra.mxu0 %v714
        %793 = vmatmul.f32.gmra.mxu0 %v723
        %v794 = vpop.f32.mrf.mxu0
        %v795 = vadd.f32 0.0, %v794
        %796 = vdwg.mxu0
        %797 = vmatpush.msra.mxu0 0.0
        %798 = vmatpush.msra.mxu0 0.0
        %799 = vmatpush.msra.mxu0 0.0
        %800 = vmatpush.msra.mxu0 0.0
        %801 = vmatpush.msra.mxu0 0.0
        %802 = vmatpush.msra.mxu0 0.0
        %803 = vmatpush.msra.mxu0 0.0
        %804 = vmatpush.msra.mxu0 0.0
        %805 = vmatpush.msra.mxu0 0.0
        %806 = vmatpush.msra.mxu0 0.0
        %807 = vmatpush.msra.mxu0 0.0
        %808 = vmatpush.msra.mxu0 0.0
        %809 = vmatpush.msra.mxu0 0.0
        %810 = vmatpush.msra.mxu0 %v735
        %811 = vmatpush.msra.mxu0 %v719
        %812 = vmatpush.msra.mxu0 %v715
        %813 = vmatmul.f32.gmra.mxu0 %v723
        %v814 = vpop.f32.mrf.mxu0
        %v815 = vadd.f32 0.0, %v814
        %816 = vdwg.mxu0
        %v817 = vld [vmem:[#allocation8] sm:$0xff]
        %v818 = vld [vmem:[#allocation8 + $0x8] sm:$0xff]
        %v819 = vld [vmem:[#allocation8 + $0x10] sm:$0xff]
        %v820 = vld [vmem:[#allocation8 + $0x18] sm:$0xff]
        %v821 = vld [vmem:[#allocation8 + $0x20] sm:$0xff]
        %v822 = vld [vmem:[#allocation8 + $0x28] sm:$0xff]
        %v823 = vld [vmem:[#allocation8 + $0x30] sm:$0xff]
        %v824 = vld [vmem:[#allocation8 + $0x38] sm:$0xff]
        %v825 = vld [vmem:[#allocation8 + $0x40] sm:$0xff]
        %v826 = vld [vmem:[#allocation8 + $0x48] sm:$0xff]
        %v827 = vld [vmem:[#allocation8 + $0x50] sm:$0xff]
        %v828 = vld [vmem:[#allocation8 + $0x58] sm:$0xff]
        %v829 = vld [vmem:[#allocation8 + $0x60] sm:$0xff]
        %v830 = vld [vmem:[#allocation8 + $0x68] sm:$0xff]
        %v831 = vld [vmem:[#allocation8 + $0x70] sm:$0xff]
        %v832 = vld [vmem:[#allocation8 + $0x78] sm:$0xff]
        %v833 = vld [vmem:[#allocation8 + $0x80] sm:$0xff]
        %v834 = vld [vmem:[#allocation8 + $0x88] sm:$0xff]
        %v835 = vld [vmem:[#allocation8 + $0x90] sm:$0xff]
        %v836 = vld [vmem:[#allocation8 + $0x98] sm:$0xff]
        %v837 = vld [vmem:[#allocation8 + $0xa0] sm:$0xff]
        %v838 = vld [vmem:[#allocation8 + $0xa8] sm:$0xff]
        %v839 = vld [vmem:[#allocation8 + $0xb0] sm:$0xff]
        %v840 = vld [vmem:[#allocation8 + $0xb8] sm:$0xff]
        %v841 = vld [vmem:[#allocation8 + $0xc0] sm:$0xff]
        %v842 = vld [vmem:[#allocation8 + $0xc8] sm:$0xff]
        %v843 = vld [vmem:[#allocation8 + $0xd0] sm:$0xff]
        %v844 = vld [vmem:[#allocation8 + $0xd8] sm:$0xff]
        %v845 = vld [vmem:[#allocation8 + $0xe0] sm:$0xff]
        %v846 = vld [vmem:[#allocation8 + $0xe8] sm:$0xff]
        %v847 = vld [vmem:[#allocation8 + $0xf0] sm:$0xff]
        %v848 = vld [vmem:[#allocation8 + $0xf8] sm:$0xff]
        %v849 = vld [vmem:[#allocation8 + $0x100] sm:$0xff]
        %v850 = vld [vmem:[#allocation8 + $0x108] sm:$0xff]
        %v851 = vld [vmem:[#allocation8 + $0x110] sm:$0xff]
        %v852 = vld [vmem:[#allocation8 + $0x118] sm:$0xff]
        %v853 = vld [vmem:[#allocation8 + $0x120] sm:$0xff]
        %v854 = vld [vmem:[#allocation8 + $0x128] sm:$0xff]
        %v855 = vld [vmem:[#allocation8 + $0x130] sm:$0xff]
        %v856 = vld [vmem:[#allocation8 + $0x138] sm:$0xff]
        %v857 = vld [vmem:[#allocation8 + $0x140] sm:$0xff]
        %v858 = vld [vmem:[#allocation8 + $0x148] sm:$0xff]
        %v859 = vld [vmem:[#allocation8 + $0x150] sm:$0xff]
        %v860 = vld [vmem:[#allocation8 + $0x158] sm:$0xff]
        %v861 = vld [vmem:[#allocation8 + $0x160] sm:$0xff]
        %v862 = vld [vmem:[#allocation8 + $0x168] sm:$0xff]
        %v863 = vld [vmem:[#allocation8 + $0x170] sm:$0xff]
        %v864 = vld [vmem:[#allocation8 + $0x178] sm:$0xff]
        %v865 = vld [vmem:[#allocation8 + $0x180] sm:$0xff]
        %v866 = vld [vmem:[#allocation8 + $0x188] sm:$0xff]
        %v867 = vld [vmem:[#allocation8 + $0x190] sm:$0xff]
        %v868 = vld [vmem:[#allocation8 + $0x198] sm:$0xff]
        %v869 = vld [vmem:[#allocation8 + $0x1a0] sm:$0xff]
        %v870 = vld [vmem:[#allocation8 + $0x1a8] sm:$0xff]
        %v871 = vld [vmem:[#allocation8 + $0x1b0] sm:$0xff]
        %v872 = vld [vmem:[#allocation8 + $0x1b8] sm:$0xff]
        %v873 = vld [vmem:[#allocation8 + $0x1c0] sm:$0xff]
        %v874 = vld [vmem:[#allocation8 + $0x1c8] sm:$0xff]
        %v875 = vld [vmem:[#allocation8 + $0x1d0] sm:$0xff]
        %v876 = vld [vmem:[#allocation8 + $0x1d8] sm:$0xff]
        %v877 = vld [vmem:[#allocation8 + $0x1e0] sm:$0xff]
        %v878 = vld [vmem:[#allocation8 + $0x1e8] sm:$0xff]
        %v879 = vld [vmem:[#allocation8 + $0x1f0] sm:$0xff]
        %v880 = vld [vmem:[#allocation8 + $0x1f8] sm:$0xff]
        %v881 = vld [vmem:[#allocation8 + $0x200] sm:$0xff]
        %v882 = vld [vmem:[#allocation8 + $0x208] sm:$0xff]
        %v883 = vld [vmem:[#allocation8 + $0x210] sm:$0xff]
        %v884 = vld [vmem:[#allocation8 + $0x218] sm:$0xff]
        %v885 = vld [vmem:[#allocation8 + $0x220] sm:$0xff]
        %v886 = vld [vmem:[#allocation8 + $0x228] sm:$0xff]
        %v887 = vld [vmem:[#allocation8 + $0x230] sm:$0xff]
        %v888 = vld [vmem:[#allocation8 + $0x238] sm:$0xff]
        %v889 = vld [vmem:[#allocation8 + $0x240] sm:$0xff]
        %v890 = vld [vmem:[#allocation8 + $0x248] sm:$0xff]
        %v891 = vld [vmem:[#allocation8 + $0x250] sm:$0xff]
        %v892 = vld [vmem:[#allocation8 + $0x258] sm:$0xff]
        %v893 = vld [vmem:[#allocation8 + $0x260] sm:$0xff]
        %v894 = vld [vmem:[#allocation8 + $0x268] sm:$0xff]
        %v895 = vld [vmem:[#allocation8 + $0x270] sm:$0xff]
        %v896 = vld [vmem:[#allocation8 + $0x278] sm:$0xff]
        %v897 = vld [vmem:[#allocation8 + $0x280] sm:$0xff]
        %v898 = vld [vmem:[#allocation8 + $0x288] sm:$0xff]
        %v899 = vld [vmem:[#allocation8 + $0x290] sm:$0xff]
        %v900 = vld [vmem:[#allocation8 + $0x298] sm:$0xff]
        %v901 = vld [vmem:[#allocation8 + $0x2a0] sm:$0xff]
        %v902 = vld [vmem:[#allocation8 + $0x2a8] sm:$0xff]
        %v903 = vld [vmem:[#allocation8 + $0x2b0] sm:$0xff]
        %v904 = vld [vmem:[#allocation8 + $0x2b8] sm:$0xff]
        %v905 = vld [vmem:[#allocation8 + $0x2c0] sm:$0xff]
        %v906 = vld [vmem:[#allocation8 + $0x2c8] sm:$0xff]
        %v907 = vld [vmem:[#allocation8 + $0x2d0] sm:$0xff]
        %v908 = vld [vmem:[#allocation8 + $0x2d8] sm:$0xff]
        %v909 = vld [vmem:[#allocation8 + $0x2e0] sm:$0xff]
        %v910 = vld [vmem:[#allocation8 + $0x2e8] sm:$0xff]
        %v911 = vld [vmem:[#allocation8 + $0x2f0] sm:$0xff]
        %v912 = vld [vmem:[#allocation8 + $0x2f8] sm:$0xff]
        %v913 = vld [vmem:[#allocation8 + $0x300] sm:$0xff]
        %v914 = vld [vmem:[#allocation8 + $0x308] sm:$0xff]
        %v915 = vld [vmem:[#allocation8 + $0x310] sm:$0xff]
        %v916 = vld [vmem:[#allocation8 + $0x318] sm:$0xff]
        %v917 = vld [vmem:[#allocation8 + $0x320] sm:$0xff]
        %v918 = vld [vmem:[#allocation8 + $0x328] sm:$0xff]
        %v919 = vld [vmem:[#allocation8 + $0x330] sm:$0xff]
        %v920 = vld [vmem:[#allocation8 + $0x338] sm:$0xff]
        %v921 = vld [vmem:[#allocation8 + $0x340] sm:$0xff]
        %v922 = vld [vmem:[#allocation8 + $0x348] sm:$0xff]
        %v923 = vld [vmem:[#allocation8 + $0x350] sm:$0xff]
        %v924 = vld [vmem:[#allocation8 + $0x358] sm:$0xff]
        %v925 = vld [vmem:[#allocation8 + $0x360] sm:$0xff]
        %v926 = vld [vmem:[#allocation8 + $0x368] sm:$0xff]
        %v927 = vld [vmem:[#allocation8 + $0x370] sm:$0xff]
        %v928 = vld [vmem:[#allocation8 + $0x378] sm:$0xff]
        %v929 = vld [vmem:[#allocation8 + $0x380] sm:$0xff]
        %v930 = vld [vmem:[#allocation8 + $0x388] sm:$0xff]
        %v931 = vld [vmem:[#allocation8 + $0x390] sm:$0xff]
        %v932 = vld [vmem:[#allocation8 + $0x398] sm:$0xff]
        %v933 = vld [vmem:[#allocation8 + $0x3a0] sm:$0xff]
        %v934 = vld [vmem:[#allocation8 + $0x3a8] sm:$0xff]
        %v935 = vld [vmem:[#allocation8 + $0x3b0] sm:$0xff]
        %v936 = vld [vmem:[#allocation8 + $0x3b8] sm:$0xff]
        %v937 = vld [vmem:[#allocation8 + $0x3c0] sm:$0xff]
        %v938 = vld [vmem:[#allocation8 + $0x3c8] sm:$0xff]
        %v939 = vld [vmem:[#allocation8 + $0x3d0] sm:$0xff]
        %v940 = vld [vmem:[#allocation8 + $0x3d8] sm:$0xff]
        %v941 = vld [vmem:[#allocation8 + $0x3e0] sm:$0xff]
        %v942 = vld [vmem:[#allocation8 + $0x3e8] sm:$0xff]
        %v943 = vld [vmem:[#allocation8 + $0x3f0] sm:$0xff]
        %v944 = vld [vmem:[#allocation8 + $0x3f8] sm:$0xff]
        %v945 = vld [vmem:[%s5] sm:$0xff]
        %947 = vset.pattern.permute.xlu0 0
        %948 = vperm.xlu0 %947, %v945
        %v949 = vpop.permute.xlu0 %948
        %951 = vmatpush.msra.mxu0 %v847
        %952 = vmatpush.msra.mxu0 %v845
        %953 = vmatpush.msra.mxu0 %v843
        %954 = vmatpush.msra.mxu0 %v841
        %955 = vmatpush.msra.mxu0 %v839
        %956 = vmatpush.msra.mxu0 %v837
        %957 = vmatpush.msra.mxu0 %v835
        %958 = vmatpush.msra.mxu0 %v833
        %959 = vmatpush.msra.mxu0 %v831
        %960 = vmatpush.msra.mxu0 %v829
        %961 = vmatpush.msra.mxu0 %v827
        %962 = vmatpush.msra.mxu0 %v825
        %963 = vmatpush.msra.mxu0 %v823
        %964 = vmatpush.msra.mxu0 %v821
        %965 = vmatpush.msra.mxu0 %v819
        %966 = vmatpush.msra.mxu0 %v817
        %967 = vmatmul.f32.gmra.mxu0 %v755
        %v968 = vpop.f32.mrf.mxu0
        %v969 = vadd.f32 %v949, %v968
        %970 = vdwg.mxu0
        %971 = vmatpush.msra.mxu0 %v879
        %972 = vmatpush.msra.mxu0 %v877
        %973 = vmatpush.msra.mxu0 %v875
        %974 = vmatpush.msra.mxu0 %v873
        %975 = vmatpush.msra.mxu0 %v871
        %976 = vmatpush.msra.mxu0 %v869
        %977 = vmatpush.msra.mxu0 %v867
        %978 = vmatpush.msra.mxu0 %v865
        %979 = vmatpush.msra.mxu0 %v863
        %980 = vmatpush.msra.mxu0 %v861
        %981 = vmatpush.msra.mxu0 %v859
        %982 = vmatpush.msra.mxu0 %v857
        %983 = vmatpush.msra.mxu0 %v855
        %984 = vmatpush.msra.mxu0 %v853
        %985 = vmatpush.msra.mxu0 %v851
        %986 = vmatpush.msra.mxu0 %v849
        %987 = vmatmul.f32.gmra.mxu0 %v775
        %v988 = vpop.f32.mrf.mxu0
        %v989 = vadd.f32 %v969, %v988
        %990 = vdwg.mxu0
        %991 = vmatpush.msra.mxu0 %v911
        %992 = vmatpush.msra.mxu0 %v909
        %993 = vmatpush.msra.mxu0 %v907
        %994 = vmatpush.msra.mxu0 %v905
        %995 = vmatpush.msra.mxu0 %v903
        %996 = vmatpush.msra.mxu0 %v901
        %997 = vmatpush.msra.mxu0 %v899
        %998 = vmatpush.msra.mxu0 %v897
        %999 = vmatpush.msra.mxu0 %v895
        %1000 = vmatpush.msra.mxu0 %v893
        %1001 = vmatpush.msra.mxu0 %v891
        %1002 = vmatpush.msra.mxu0 %v889
        %1003 = vmatpush.msra.mxu0 %v887
        %1004 = vmatpush.msra.mxu0 %v885
        %1005 = vmatpush.msra.mxu0 %v883
        %1006 = vmatpush.msra.mxu0 %v881
        %1007 = vmatmul.f32.gmra.mxu0 %v795
        %v1008 = vpop.f32.mrf.mxu0
        %v1009 = vadd.f32 %v989, %v1008
        %1010 = vdwg.mxu0
        %1011 = vmatpush.msra.mxu0 %v943
        %1012 = vmatpush.msra.mxu0 %v941
        %1013 = vmatpush.msra.mxu0 %v939
        %1014 = vmatpush.msra.mxu0 %v937
        %1015 = vmatpush.msra.mxu0 %v935
        %1016 = vmatpush.msra.mxu0 %v933
        %1017 = vmatpush.msra.mxu0 %v931
        %1018 = vmatpush.msra.mxu0 %v929
        %1019 = vmatpush.msra.mxu0 %v927
        %1020 = vmatpush.msra.mxu0 %v925
        %1021 = vmatpush.msra.mxu0 %v923
        %1022 = vmatpush.msra.mxu0 %v921
        %1023 = vmatpush.msra.mxu0 %v919
        %1024 = vmatpush.msra.mxu0 %v917
        %1025 = vmatpush.msra.mxu0 %v915
        %1026 = vmatpush.msra.mxu0 %v913
        %1027 = vmatmul.f32.gmra.mxu0 %v815
        %v1028 = vpop.f32.mrf.mxu0
        %v1029 = vadd.f32 %v1009, %v1028
        %1030 = vdwg.mxu0
        %1031 = vmatpush.msra.mxu0 %v848
        %1032 = vmatpush.msra.mxu0 %v846
        %1033 = vmatpush.msra.mxu0 %v844
        %1034 = vmatpush.msra.mxu0 %v842
        %1035 = vmatpush.msra.mxu0 %v840
        %1036 = vmatpush.msra.mxu0 %v838
        %1037 = vmatpush.msra.mxu0 %v836
        %1038 = vmatpush.msra.mxu0 %v834
        %1039 = vmatpush.msra.mxu0 %v832
        %1040 = vmatpush.msra.mxu0 %v830
        %1041 = vmatpush.msra.mxu0 %v828
        %1042 = vmatpush.msra.mxu0 %v826
        %1043 = vmatpush.msra.mxu0 %v824
        %1044 = vmatpush.msra.mxu0 %v822
        %1045 = vmatpush.msra.mxu0 %v820
        %1046 = vmatpush.msra.mxu0 %v818
        %1047 = vmatmul.f32.gmra.mxu0 %v755
        %v1048 = vpop.f32.mrf.mxu0
        %v1049 = vadd.f32 %v949, %v1048
        %1050 = vdwg.mxu0
        %1051 = vmatpush.msra.mxu0 %v880
        %1052 = vmatpush.msra.mxu0 %v878
        %1053 = vmatpush.msra.mxu0 %v876
        %1054 = vmatpush.msra.mxu0 %v874
        %1055 = vmatpush.msra.mxu0 %v872
        %1056 = vmatpush.msra.mxu0 %v870
        %1057 = vmatpush.msra.mxu0 %v868
        %1058 = vmatpush.msra.mxu0 %v866
        %1059 = vmatpush.msra.mxu0 %v864
        %1060 = vmatpush.msra.mxu0 %v862
        %1061 = vmatpush.msra.mxu0 %v860
        %1062 = vmatpush.msra.mxu0 %v858
        %1063 = vmatpush.msra.mxu0 %v856
        %1064 = vmatpush.msra.mxu0 %v854
        %1065 = vmatpush.msra.mxu0 %v852
        %1066 = vmatpush.msra.mxu0 %v850
        %1067 = vmatmul.f32.gmra.mxu0 %v775
        %v1068 = vpop.f32.mrf.mxu0
        %v1069 = vadd.f32 %v1049, %v1068
        %1070 = vdwg.mxu0
        %1071 = vmatpush.msra.mxu0 %v912
        %1072 = vmatpush.msra.mxu0 %v910
        %1073 = vmatpush.msra.mxu0 %v908
        %1074 = vmatpush.msra.mxu0 %v906
        %1075 = vmatpush.msra.mxu0 %v904
        %1076 = vmatpush.msra.mxu0 %v902
        %1077 = vmatpush.msra.mxu0 %v900
        %1078 = vmatpush.msra.mxu0 %v898
        %1079 = vmatpush.msra.mxu0 %v896
        %1080 = vmatpush.msra.mxu0 %v894
        %1081 = vmatpush.msra.mxu0 %v892
        %1082 = vmatpush.msra.mxu0 %v890
        %1083 = vmatpush.msra.mxu0 %v888
        %1084 = vmatpush.msra.mxu0 %v886
        %1085 = vmatpush.msra.mxu0 %v884
        %1086 = vmatpush.msra.mxu0 %v882
        %1087 = vmatmul.f32.gmra.mxu0 %v795
        %v1088 = vpop.f32.mrf.mxu0
        %v1089 = vadd.f32 %v1069, %v1088
        %1090 = vdwg.mxu0
        %1091 = vmatpush.msra.mxu0 %v944
        %1092 = vmatpush.msra.mxu0 %v942
        %1093 = vmatpush.msra.mxu0 %v940
        %1094 = vmatpush.msra.mxu0 %v938
        %1095 = vmatpush.msra.mxu0 %v936
        %1096 = vmatpush.msra.mxu0 %v934
        %1097 = vmatpush.msra.mxu0 %v932
        %1098 = vmatpush.msra.mxu0 %v930
        %1099 = vmatpush.msra.mxu0 %v928
        %1100 = vmatpush.msra.mxu0 %v926
        %1101 = vmatpush.msra.mxu0 %v924
        %1102 = vmatpush.msra.mxu0 %v922
        %1103 = vmatpush.msra.mxu0 %v920
        %1104 = vmatpush.msra.mxu0 %v918
        %1105 = vmatpush.msra.mxu0 %v916
        %1106 = vmatpush.msra.mxu0 %v914
        %1107 = vmatmul.f32.gmra.mxu0 %v815
        %v1108 = vpop.f32.mrf.mxu0
        %v1109 = vadd.f32 %v1089, %v1108
        %1110 = vdwg.mxu0
        %1111 = vst [vmem:[%s317] sm:$0xff] %v1029
        %1112 = vst [vmem:[%s317 + $0x8] sm:$0xff] %v1109
        %s1113 = sand.u32 %s164, 1
        %s1114 = scalar_lea.sflag [#allocation4], %s1113
        %s1115 = sand.u32 %s164, 1
        %s1116 = smul.addr %s1115, 16
        %s1117 = scalar_lea.vmem [#allocation10], %s1116
        // Predicated region
        $region61: #{tpu_custom_call.1} parent=43 // pred_check
          %p1118 = pneg %p174
        $region62: #{tpu_custom_call.1} parent=43 // pred_check_branch
          %1120 = sbr.rel (%p1118) target = $region64
        $region63: #{tpu_custom_call.1} parent=43 // pred_region
          %1122 = vsyncadd %s1114, 0
          %s1123 = smul.addr %s25, 2
          %s1124 = smul.addr %s1123, 8
          %s1125 = scalar_lea.hbm %s6, %s1124
          %s1127 = sshll.u32 %s1117, 4
          %s1128 = int_to_ptr.vmem [resolvable:$true] %s1127
          %s1129 = sshll.u32 %s1125, 4
          %s1130 = int_to_ptr.hbm [resolvable:$true] %s1129
          %1132 = dma.vmem_to_hbm [thread:$0]  %s1128, 256, %s1130, %s1114
        $region64: #{tpu_custom_call.1} parent=43 // pred_fallthru
          _
      $region44: #{tpu_custom_call.1} parent=5 // pred_fallthru
        _
      %p1133 = scmp.le.s32.totalorder 2, %s20
      // Predicated region
      $region65: #{tpu_custom_call.1} parent=5 // pred_check
        %p1134 = pneg %p1133
      $region66: #{tpu_custom_call.1} parent=5 // pred_check_branch
        %1136 = sbr.rel (%p1134) target = $region68
      $region67: #{tpu_custom_call.1} parent=5 // pred_region
        %s1137 = ssub.s32 %s20, 2
        // Predicated region
        $region69: #{tpu_custom_call.1} parent=67 // pred_check
          %p1138 = pneg %p180
        $region70: #{tpu_custom_call.1} parent=67 // pred_check_branch
          %1140 = sbr.rel (%p1138) target = $region72
        $region71: #{tpu_custom_call.1} parent=67 // pred_region
          %s1141 = sand.u32 %s165, 1
          %s1142 = scalar_lea.sflag [#allocation4], %s1141
          %s1143 = sand.u32 %s165, 1
          %s1144 = smul.addr %s1143, 16
          %s1145 = scalar_lea.vmem [#allocation10], %s1144
          %1147 = dma.done %s1142, 256
        $region72: #{tpu_custom_call.1} parent=67 // pred_fallthru
          _
      $region68: #{tpu_custom_call.1} parent=5 // pred_fallthru
        _
    $region6: #{tpu_custom_call.1} parent=1 // loop_footer
      %s24 = sadd.s32 1, %s20
    $region7: #{tpu_custom_call.1} parent=1 // loop_footer_branch
      %19 = sbr.rel target = $region3
    $region8: #{tpu_custom_call.1} parent=1 // loop_exit
      _
    %1148 = vsyncpa [#allocation3], 1
    %s1149 = scalar_lea.sflag [#allocation3], 1
    %1150 = vsyncpa %s1149, 1
    %1151 = vsyncpa [#allocation6], 1
    %1152 = vsyncpa [#allocation9], 1
    %1153 = vsyncpa [#allocation4], 1
    %s1154 = scalar_lea.sflag [#allocation4], 1
    %1155 = vsyncpa %s1154, 1

</llo_original>
